<compile_context>
chip_gen: v7x
topology: tpu7x:2x2x1
jax: 0.10.0
libtpu: 0.0.40
codegen_flags: <defaults>
</compile_context>

<pallas_src>
import functools

import jax
import jax.numpy as jnp
from jax.experimental import pallas as pl
from jax.experimental.pallas import tpu as pltpu


# --------------------------------------------------------------------------- #
# Kernel
# --------------------------------------------------------------------------- #
def _norm_linear_kernel(x_ref, w_ref, o_ref, *scratch,
                        d_total, need_mask, eps_sq, out_is_acc):
    """One (tb, to) output tile; grid axis 2 (k) is the reduction axis."""
    if out_is_acc:
        xsq_ref, wsq_ref = scratch          # f32 output doubles as accumulator
        acc_ref = o_ref
    else:
        acc_ref, xsq_ref, wsq_ref = scratch

    k = pl.program_id(2)
    tk = x_ref.shape[1]

    @pl.when(k == 0)
    def _init():
        acc_ref[...] = jnp.zeros_like(acc_ref)
        xsq_ref[...] = jnp.zeros_like(xsq_ref)
        wsq_ref[...] = jnp.zeros_like(wsq_ref)

    x_t = x_ref[...]
    w_t = w_ref[...]
    if need_mask:
        # Zero the K-tail lanes that read out of bounds (exact for dot + norms).
        valid = d_total - k * tk
        x_t = jnp.where(
            jax.lax.broadcasted_iota(jnp.int32, x_t.shape, 1) < valid,
            x_t, jnp.zeros_like(x_t))
        w_t = jnp.where(
            jax.lax.broadcasted_iota(jnp.int32, w_t.shape, 1) < valid,
            w_t, jnp.zeros_like(w_t))

    # Main MXU contraction (NT orientation: contract last dims), f32 accumulate.
    acc_ref[...] += jax.lax.dot_general(
        x_t, w_t,
        dimension_numbers=(((1,), (1,)), ((), ())),
        preferred_element_type=jnp.float32,
    )

    # Fused row norms (ride in MXU/VPU/XLU slack of the main matmul).
    xf = x_t.astype(jnp.float32)
    wf = w_t.astype(jnp.float32)
    xsq_ref[...] += jnp.sum(xf * xf, axis=1, keepdims=True)            # (tb, 1)
    ones8 = jnp.ones((8, tk), jnp.float32)
    wsq_ref[...] += jax.lax.dot_general(                               # (8, to), lane-major
        ones8, wf * wf,
        dimension_numbers=(((1,), (1,)), ((), ())),
        preferred_element_type=jnp.float32,
    )

    @pl.when(k == pl.num_programs(2) - 1)
    def _finalize():
        # 1/max(||v||, eps) == rsqrt(max(||v||^2, eps^2)); broadcasts are layout-natural.
        x_inv = jax.lax.rsqrt(jnp.maximum(xsq_ref[...], eps_sq))       # (tb, 1)
        w_inv = jax.lax.rsqrt(jnp.maximum(wsq_ref[0:1, :], eps_sq))    # (1, to)
        o_ref[...] = (acc_ref[...] * x_inv * w_inv).astype(o_ref.dtype)


# --------------------------------------------------------------------------- #
# Tile / VMEM heuristics
# --------------------------------------------------------------------------- #
def _round_up(a: int, m: int) -> int:
    return ((a + m - 1) // m) * m


def _round_down(a: int, m: int) -> int:
    return max(m, (a // m) * m)


def _vmem_capacity_bytes() -> int:
    try:
        cap = int(getattr(pltpu.get_tpu_info(), "vmem_capacity_bytes", 0))
        if cap > 0:
            return cap
    except Exception:
        pass
    return 64 * 1024 * 1024  # conservative (v7x-sized) fallback


def _vmem_footprint(tb, to, tk, in_isz, out_isz, out_is_acc):
    inputs = 2 * (tb + to) * tk * in_isz        # double-buffered x / W tiles
    outputs = 2 * tb * to * out_isz             # double-buffered output tile
    acc = 0 if out_is_acc else tb * to * 4      # f32 accumulator scratch
    norms = (tb + 8 * to) * 4                   # fused-norm scratches
    return inputs + outputs + acc + norms


def _choose_tiles(B, O, D, in_isz, out_isz, out_is_acc, tb, to, tk, budget, sublane):
    # Sanitize requested sizes to legal alignments, then shrink to the problem.
    tb = min(_round_down(tb, sublane), _round_up(B, sublane))
    to = min(_round_down(to, 128), _round_up(O, 128))
    tk = min(_round_down(tk, 128), _round_up(D, 128))

    # Shrink (K first: it does not hurt arithmetic intensity) until the
    # double-buffered working set fits the generation-aware VMEM budget.
    while _vmem_footprint(tb, to, tk, in_isz, out_isz, out_is_acc) > budget:
        if tk > 128:
            tk = _round_down(tk // 2, 128)
        elif to > 128:
            to = _round_down(to // 2, 128)
        elif tb > sublane:
            tb = _round_down(tb // 2, sublane)
        else:
            break

    # v7x megacore: make sure the parallel (i, j) grid has >= 2 blocks.
    if pl.cdiv(B, tb) * pl.cdiv(O, to) < 2:
        if to > 128 and O > 128:
            to = _round_down(to // 2, 128)
        elif tb > sublane and B > sublane:
            tb = _round_down(tb // 2, sublane)

    need_mask = (D % tk) != 0
    return tb, to, tk, need_mask


# --------------------------------------------------------------------------- #
# Wrapper
# --------------------------------------------------------------------------- #
@functools.partial(jax.jit, static_argnames=("tb", "to", "tk", "compute_dtype"))
def norm_linear_product(x: jax.Array, weight: jax.Array, *,
                        tb: int = 1024, to: int = 1024, tk: int = 2048,
                        compute_dtype=None) -> jax.Array:
    """x: (B, in_features), weight: (out_features, in_features) -> (B, out_features)."""
    B, D = x.shape
    O, D2 = weight.shape
    assert D == D2, "in_features mismatch"
    eps = 1e-12
    out_dtype = x.dtype

    if compute_dtype is not None and jnp.dtype(compute_dtype) != jnp.dtype(x.dtype):
        # Optional reduced-precision streaming; accumulation stays f32 in-kernel.
        # Note: this (and default MXU precision) is not bit-identical to a
        # Precision.HIGHEST f32 reference; tolerance ~1e-3 (f32) / ~1e-2 (bf16).
        x = x.astype(compute_dtype)
        weight = weight.astype(compute_dtype)

    in_isz = jnp.dtype(x.dtype).itemsize
    out_isz = jnp.dtype(out_dtype).itemsize
    out_is_acc = jnp.dtype(out_dtype) == jnp.dtype(jnp.float32)
    sublane = max(8, 32 // in_isz)          # 8 for f32, 16 for bf16, 32 for int8/fp8

    vmem_cap = _vmem_capacity_bytes()
    budget = int(0.70 * vmem_cap)           # headroom for compiler scratch
    tb, to, tk, need_mask = _choose_tiles(
        B, O, D, in_isz, out_isz, out_is_acc, tb, to, tk, budget, sublane)

    grid = (pl.cdiv(B, tb), pl.cdiv(O, to), pl.cdiv(D, tk))

    scratch_shapes = []
    if not out_is_acc:
        scratch_shapes.append(pltpu.VMEM((tb, to), jnp.float32))    # accumulator
    scratch_shapes += [
        pltpu.VMEM((tb, 1), jnp.float32),    # sum_k x^2 per batch row
        pltpu.VMEM((8, to), jnp.float32),    # sum_k w^2 per output row (lane-major)
    ]

    kernel = functools.partial(
        _norm_linear_kernel,
        d_total=D, need_mask=need_mask, eps_sq=eps * eps, out_is_acc=out_is_acc)

    cost = pl.CostEstimate(
        flops=2 * B * O * D + 2 * (B + 8 * O) * D,
        transcendentals=B + O,
        bytes_accessed=(B * D * in_isz * grid[1]       # x tiles re-read per j
                        + O * D * in_isz * grid[0]     # W tiles re-read per i
                        + B * O * out_isz),            # output writeback
    )

    vmem_limit = max(32 * 1024 * 1024,
                     int(min(0.75 * vmem_cap, 128 * 1024 * 1024)))

    return pl.pallas_call(
        kernel,
        out_shape=jax.ShapeDtypeStruct((B, O), out_dtype),
        grid_spec=pltpu.PrefetchScalarGridSpec(
            num_scalar_prefetch=0,
            grid=grid,
            in_specs=[
                pl.BlockSpec((tb, tk), lambda i, j, k: (i, k)),   # x tile
                pl.BlockSpec((to, tk), lambda i, j, k: (j, k)),   # W tile (NT matmul)
            ],
            out_specs=pl.BlockSpec((tb, to), lambda i, j, k: (i, j)),
            scratch_shapes=scratch_shapes,
        ),
        compiler_params=pltpu.CompilerParams(
            dimension_semantics=("parallel", "parallel", "arbitrary"),
            vmem_limit_bytes=vmem_limit,
        ),
        cost_estimate=cost,
    )(x, weight)


# --------------------------------------------------------------------------- #
# Reference + demo
# --------------------------------------------------------------------------- #
def _reference(x, weight, eps=1e-12):
    xn = x / jnp.maximum(jnp.linalg.norm(x, axis=-1, keepdims=True), eps)
    wn = weight / jnp.maximum(jnp.linalg.norm(weight, axis=-1, keepdims=True), eps)
    return jnp.matmul(xn, wn.T, precision=jax.lax.Precision.HIGHEST)


if __name__ == "__main__":
    key = jax.random.PRNGKey(0)

    # (batch, in_features, out_features, call kwargs, input dtype, tolerance)
    cases = [
        (256, 512, 512, {}, jnp.float32, 1e-3),           # single-k, f32 out-as-accumulator, megacore split
        (10, 96, 40, {}, jnp.float32, 1e-3),               # fully ragged, K-tail mask, partial blocks
        (24, 272, 136, dict(tk=128), jnp.float32, 1e-3),   # multi-k accumulation + K-tail mask
        (64, 256, 192, {}, jnp.bfloat16, 2e-2),            # bf16 streams, f32 scratch accumulator
    ]

    for batch, d_in, d_out, kwargs, dtype, tol in cases:
        key, k_x, k_w = jax.random.split(key, 3)
        x = jax.random.normal(k_x, (batch, d_in), dtype=jnp.float32)
        # init_type='insightface': weight ~ Normal(mean=0, std=0.01), shape (out, in)
        w = 0.01 * jax.random.normal(k_w, (d_out, d_in), dtype=jnp.float32)
        x = x.astype(dtype)
        w = w.astype(dtype)

        out = jax.block_until_ready(norm_linear_product(x, w, **kwargs))
        ref = _reference(x.astype(jnp.float32), w.astype(jnp.float32))

        assert out.shape == (batch, d_out)
        ok = bool(jnp.allclose(out.astype(jnp.float32), ref, atol=tol, rtol=tol))
        assert ok, (
            f"mismatch vs reference for {(batch, d_in, d_out, dtype.__name__)}: "
            f"max abs err = {float(jnp.max(jnp.abs(out.astype(jnp.float32) - ref)))}"
        )

    print("KERNEL_OK")
</pallas_src>

<mosaic_0001>
module attributes {stable_mosaic.version = 11 : i64} {
  func.func @_norm_linear_kernel(%arg0: i32, %arg1: i32, %arg2: i32, %arg3: memref<256x512xf32, #tpu.memory_space<vmem>>, %arg4: memref<256x512xf32, #tpu.memory_space<vmem>>, %arg5: memref<256x256xf32, #tpu.memory_space<vmem>>, %arg6: memref<256x1xf32, #tpu.memory_space<vmem>>, %arg7: memref<8x256xf32, #tpu.memory_space<vmem>>) attributes {dimension_semantics = [#tpu.dimension_semantics<parallel>, #tpu.dimension_semantics<parallel>, #tpu.dimension_semantics<arbitrary>], iteration_bounds = array<i64: 1, 2, 1>, scalar_prefetch = 0 : i64, scratch_operands = 2 : i64, tpu.core_type = #tpu.core_type<tc>, window_params = [{transform_indices = @transform_0, window_bounds = array<i64: 256, 512>}, {transform_indices = @transform_1, window_bounds = array<i64: 256, 512>}, {transform_indices = @transform_2, window_bounds = array<i64: 256, 256>}]} {
    %c0_i32 = arith.constant 0 : i32
    %0 = arith.cmpi eq, %arg2, %c0_i32 : i32
    %1 = arith.extui %0 : i1 to i32
    %c0_i32_0 = arith.constant 0 : i32
    %2 = arith.cmpi ne, %1, %c0_i32_0 : i32
    scf.if %2 {
      %cst_21 = arith.constant 0.000000e+00 : f32
      %24 = vector.broadcast %cst_21 : f32 to vector<256x256xf32>
      %c0_22 = arith.constant 0 : index
      %c0_23 = arith.constant 0 : index
      %25 = vector.load %arg5[%c0_22, %c0_23] : memref<256x256xf32, #tpu.memory_space<vmem>>, vector<256x256xf32>
      tpu.vector_store %arg5[%c0_22, %c0_23], %24 {strides = array<i32>} : memref<256x256xf32, #tpu.memory_space<vmem>>, vector<256x256xf32>,
      %cst_24 = arith.constant 0.000000e+00 : f32
      %26 = vector.broadcast %cst_24 : f32 to vector<256x1xf32>
      %c0_25 = arith.constant 0 : index
      %c0_26 = arith.constant 0 : index
      %27 = vector.load %arg6[%c0_25, %c0_26] : memref<256x1xf32, #tpu.memory_space<vmem>>, vector<256x1xf32>
      tpu.vector_store %arg6[%c0_25, %c0_26], %26 {strides = array<i32>} : memref<256x1xf32, #tpu.memory_space<vmem>>, vector<256x1xf32>,
      %cst_27 = arith.constant 0.000000e+00 : f32
      %28 = vector.broadcast %cst_27 : f32 to vector<8x256xf32>
      %c0_28 = arith.constant 0 : index
      %c0_29 = arith.constant 0 : index
      %29 = vector.load %arg7[%c0_28, %c0_29] : memref<8x256xf32, #tpu.memory_space<vmem>>, vector<8x256xf32>
      tpu.vector_store %arg7[%c0_28, %c0_29], %28 {strides = array<i32>} : memref<8x256xf32, #tpu.memory_space<vmem>>, vector<8x256xf32>,
    } else {
    }
    %c0 = arith.constant 0 : index
    %c0_1 = arith.constant 0 : index
    %3 = vector.load %arg3[%c0, %c0_1] : memref<256x512xf32, #tpu.memory_space<vmem>>, vector<256x512xf32>
    %c0_2 = arith.constant 0 : index
    %c0_3 = arith.constant 0 : index
    %4 = vector.load %arg4[%c0_2, %c0_3] : memref<256x512xf32, #tpu.memory_space<vmem>>, vector<256x512xf32>
    %c0_4 = arith.constant 0 : index
    %c0_5 = arith.constant 0 : index
    %5 = vector.load %arg5[%c0_4, %c0_5] : memref<256x256xf32, #tpu.memory_space<vmem>>, vector<256x256xf32>
    %cst = arith.constant dense<0.000000e+00> : vector<256x256xf32>
    %6 = tpu.matmul %3, %4, %cst {dimension_numbers = #tpu.dot_dimension_numbers<[1], [1], [0], [0], [0, 0, 1, 0], [], []>} : vector<256x512xf32>, vector<256x512xf32>, vector<256x256xf32> -> vector<256x256xf32>
    %7 = arith.addf %5, %6 : vector<256x256xf32>
    %c0_6 = arith.constant 0 : index
    %c0_7 = arith.constant 0 : index
    %8 = vector.load %arg5[%c0_6, %c0_7] : memref<256x256xf32, #tpu.memory_space<vmem>>, vector<256x256xf32>
    tpu.vector_store %arg5[%c0_6, %c0_7], %7 {strides = array<i32>} : memref<256x256xf32, #tpu.memory_space<vmem>>, vector<256x256xf32>,
    %c0_8 = arith.constant 0 : index
    %c0_9 = arith.constant 0 : index
    %9 = vector.load %arg6[%c0_8, %c0_9] : memref<256x1xf32, #tpu.memory_space<vmem>>, vector<256x1xf32>
    %10 = arith.mulf %3, %3 : vector<256x512xf32>
    %cst_10 = arith.constant dense<0.000000e+00> : vector<256xf32>
    %11 = vector.multi_reduction <add>, %10, %cst_10 [1] : vector<256x512xf32> to vector<256xf32>
    %12 = vector.shape_cast %11 : vector<256xf32> to vector<256x1xf32>
    %13 = arith.addf %9, %12 : vector<256x1xf32>
    %c0_11 = arith.constant 0 : index
    %c0_12 = arith.constant 0 : index
    %14 = vector.load %arg6[%c0_11, %c0_12] : memref<256x1xf32, #tpu.memory_space<vmem>>, vector<256x1xf32>
    tpu.vector_store %arg6[%c0_11, %c0_12], %13 {strides = array<i32>} : memref<256x1xf32, #tpu.memory_space<vmem>>, vector<256x1xf32>,
    %cst_13 = arith.constant 1.000000e+00 : f32
    %15 = vector.broadcast %cst_13 : f32 to vector<8x512xf32>
    %c0_14 = arith.constant 0 : index
    %c0_15 = arith.constant 0 : index
    %16 = vector.load %arg7[%c0_14, %c0_15] : memref<8x256xf32, #tpu.memory_space<vmem>>, vector<8x256xf32>
    %17 = arith.mulf %4, %4 : vector<256x512xf32>
    %cst_16 = arith.constant dense<0.000000e+00> : vector<8x256xf32>
    %18 = tpu.matmul %15, %17, %cst_16 {dimension_numbers = #tpu.dot_dimension_numbers<[1], [1], [0], [0], [0, 0, 1, 0], [], []>} : vector<8x512xf32>, vector<256x512xf32>, vector<8x256xf32> -> vector<8x256xf32>
    %19 = arith.addf %16, %18 : vector<8x256xf32>
    %c0_17 = arith.constant 0 : index
    %c0_18 = arith.constant 0 : index
    %20 = vector.load %arg7[%c0_17, %c0_18] : memref<8x256xf32, #tpu.memory_space<vmem>>, vector<8x256xf32>
    tpu.vector_store %arg7[%c0_17, %c0_18], %19 {strides = array<i32>} : memref<8x256xf32, #tpu.memory_space<vmem>>, vector<8x256xf32>,
    %c0_i32_19 = arith.constant 0 : i32
    %21 = arith.cmpi eq, %arg2, %c0_i32_19 : i32
    %22 = arith.extui %21 : i1 to i32
    %c0_i32_20 = arith.constant 0 : i32
    %23 = arith.cmpi ne, %22, %c0_i32_20 : i32
    scf.if %23 {
      %c0_21 = arith.constant 0 : index
      %c0_22 = arith.constant 0 : index
      %24 = vector.load %arg6[%c0_21, %c0_22] : memref<256x1xf32, #tpu.memory_space<vmem>>, vector<256x1xf32>
      %cst_23 = arith.constant 1.000000e-24 : f32
      %25 = vector.broadcast %cst_23 : f32 to vector<256x1xf32>
      %26 = arith.maximumf %24, %25 : vector<256x1xf32>
      %27 = math.rsqrt %26 : vector<256x1xf32>
      %c0_24 = arith.constant 0 : index
      %c0_25 = arith.constant 0 : index
      %28 = vector.load %arg7[%c0_24, %c0_25] : memref<8x256xf32, #tpu.memory_space<vmem>>, vector<1x256xf32>
      %cst_26 = arith.constant 1.000000e-24 : f32
      %29 = vector.broadcast %cst_26 : f32 to vector<1x256xf32>
      %30 = arith.maximumf %28, %29 : vector<1x256xf32>
      %31 = math.rsqrt %30 : vector<1x256xf32>
      %c0_27 = arith.constant 0 : index
      %c0_28 = arith.constant 0 : index
      %32 = vector.load %arg5[%c0_27, %c0_28] : memref<256x256xf32, #tpu.memory_space<vmem>>, vector<256x256xf32>
      %33 = vector.broadcast %27 : vector<256x1xf32> to vector<256x256xf32>
      %34 = arith.mulf %32, %33 : vector<256x256xf32>
      %35 = vector.broadcast %31 : vector<1x256xf32> to vector<256x256xf32>
      %36 = arith.mulf %34, %35 : vector<256x256xf32>
      %c0_29 = arith.constant 0 : index
      %c0_30 = arith.constant 0 : index
      %37 = vector.load %arg5[%c0_29, %c0_30] : memref<256x256xf32, #tpu.memory_space<vmem>>, vector<256x256xf32>
      tpu.vector_store %arg5[%c0_29, %c0_30], %36 {strides = array<i32>} : memref<256x256xf32, #tpu.memory_space<vmem>>, vector<256x256xf32>,
    } else {
    }
    return
  }
  func.func @transform_0(%arg0: i32, %arg1: i32, %arg2: i32) -> (i32, i32) {
    %c0_i32 = arith.constant 0 : i32
    return %arg0, %arg2 : i32, i32
  }
  func.func @transform_1(%arg0: i32, %arg1: i32, %arg2: i32) -> (i32, i32) {
    %c0_i32 = arith.constant 0 : i32
    return %arg1, %arg2 : i32, i32
  }
  func.func @transform_2(%arg0: i32, %arg1: i32, %arg2: i32) -> (i32, i32) {
    %c0_i32 = arith.constant 0 : i32
    return %arg0, %arg1 : i32, i32
  }
}

</mosaic_0001>

<llo_original>
// kernel: norm_linear_product.1
$region0: #{norm_linear_product.1}
  #allocation0 [shape = 'u32[]', space=smem, size = 0x4, offset = 0x4, fixed_abs, tag = 'smem constant byte address 0x4 - core index']
  #allocation1 [shape = 'u32[144,128]{1,0:T(1,128)}', space=vmem, size = 0x12000, scoped, tag = 'internal scratch']
  #allocation2 [shape = 'f32[256,1]{1,0:T(8,128)}', space=vmem, size = 0x20000, scoped, tag = 'scratch operand']
  #allocation3 [shape = 'f32[8,256]{1,0:T(8,128)}', space=vmem, size = 0x2000, scoped, tag = 'scratch operand']
  %s0 = inlined_call_operand.hbm [shape: f32[256,512], index: 0, kind: input, shape index: {}]
  %s1 = inlined_call_operand.hbm [shape: f32[512,512], index: 1, kind: input, shape index: {}]
  %s2 = inlined_call_operand.hbm [shape: f32[256,512], index: 2, kind: output, shape index: {}]
  %s3 = sld [smem:[#allocation0]]
  $region57: #{norm_linear_product.1} parent=0
    _
  %s5 = ssub.s32 1, %s3
  %s6 = scalar_select 0, %s5, %s3
  $region1: #{norm_linear_product.1} parent=0
    #allocation4 [shape = 'u8[524288]{0}', space=vmem, size = 0x80000, scoped, tag = 'input window, operand 0, single buffered']
    #allocation5 [shape = 's32[2]{0}', space=sflag, size = 0x8, scoped, tag = 'scoped memory for norm_linear_product.1']
    #allocation6 [shape = 's32[2]{0}', space=sflag, size = 0x8, scoped, tag = 'scoped memory for norm_linear_product.1']
    #allocation7 [shape = 'u8[1048576]{0}', space=vmem, size = 0x100000, scoped, tag = 'input window, operand 1']
    #allocation8 [shape = 's32[2]{0}', space=sflag, size = 0x8, scoped, tag = 'scoped memory for norm_linear_product.1']
    #allocation9 [shape = 'u8[524288]{0}', space=vmem, size = 0x80000, scoped, tag = 'output window, operand 0']
    %7 = vsyncpa [#allocation5], 0
    %8 = vsyncpa [#allocation8], 0
    %s9 = scalar_lea.sflag [#allocation8], 1
    %10 = vsyncpa %s9, 0
    %11 = vsyncpa [#allocation6], 0
    %s12 = scalar_lea.sflag [#allocation6], 1
    %13 = vsyncpa %s12, 0
    loop: start=0, step=1, limit=4
    $region2: #{norm_linear_product.1} parent=1 // loop_pre_header
      _
    $region3: #{norm_linear_product.1} parent=1 // loop_header
      %s15 = sphi 0, %s19
      %p16 = scmp.ge.s32.totalorder %s15, 4
      %s22 = sphi 0, %s41
      %s23 = sphi 0, %s37
      %s24 = sphi 0, %s33
      %s25 = sphi 0, %s22
      %s26 = sphi 0, %s23
      %s27 = sphi 0, %s24
      %s28 = sphi 0, %s25
      %s29 = sphi 0, %s26
      %s30 = sphi 0, %s27
      %s46 = sphi 0, %s48
      %s49 = sphi 0, %s46
      %s50 = sphi 0, %s49
      %s66 = sphi 0, %s50
      %s74 = sphi 0, %s76
      %s77 = sphi 0, %s74
      %s78 = sphi 0, %s77
      %s94 = sphi 0, %s78
      %s102 = sphi 0, %s104
      %s105 = sphi 0, %s102
      %s106 = sphi 0, %s105
      %s122 = sphi 0, %s106
    $region4: #{norm_linear_product.1} parent=1 // loop_header_branch
      %18 = sbr.rel (%p16) target = $region8
    $region5: #{norm_linear_product.1} parent=1 // loop_body
      %s20 = ssub.s32 %s15, 1
      %s21 = ssub.s32 %s15, 2
      %s31 = sadd.s32 1, %s24
      %p32 = scmp.ge.s32.totalorder %s31, 1
      %s33 = scalar_select %p32, 0, %s31
      %s34 = sadd.s32 1, %s23
      %s35 = scalar_select %p32, %s34, %s23
      %p36 = scmp.ge.s32.totalorder %s35, 2
      %s37 = scalar_select %p36, 0, %s35
      %s38 = sadd.s32 1, %s22
      %s39 = scalar_select %p36, %s38, %s22
      %p40 = scmp.ge.s32.totalorder %s39, 1
      %s41 = scalar_select %p40, 0, %s39
      %s42 = ssub.s32 %s22, %s41
      %s43 = ssub.s32 %s24, %s33
      %s44 = sor.u32 %s42, %s43
      %p45 = scmp.eq.s32.totalorder %s44, 0
      %s47 = sadd.s32 %s46, 1
      %s48 = scalar_select %p45, %s46, %s47
      %p51 = pneg %p45
      %p52 = scmp.eq.s32.totalorder %s15, 1
      %p53 = por %p51, %p52
      %p54 = scmp.ne.s32.totalorder %s46, %s49
      %p55 = scmp.eq.s32.totalorder %s15, 0
      %p56 = por %p54, %p55
      %p57 = scmp.ne.s32.totalorder %s46, %s49
      %p58 = scmp.eq.s32.totalorder %s20, 1
      %p59 = por %p57, %p58
      %p60 = scmp.ne.s32.totalorder %s49, %s50
      %p61 = scmp.eq.s32.totalorder %s20, 0
      %p62 = por %p60, %p61
      %p63 = scmp.ne.s32.totalorder %s49, %s50
      %p64 = scmp.eq.s32.totalorder %s21, 1
      %p65 = por %p63, %p64
      %p67 = scmp.ne.s32.totalorder %s50, %s66
      %p68 = scmp.eq.s32.totalorder %s21, 0
      %p69 = por %p67, %p68
      %s70 = ssub.s32 %s23, %s37
      %s71 = ssub.s32 %s24, %s33
      %s72 = sor.u32 %s70, %s71
      %p73 = scmp.eq.s32.totalorder %s72, 0
      %s75 = sadd.s32 %s74, 1
      %s76 = scalar_select %p73, %s74, %s75
      %p79 = pneg %p73
      %p80 = scmp.eq.s32.totalorder %s15, 1
      %p81 = por %p79, %p80
      %p82 = scmp.ne.s32.totalorder %s74, %s77
      %p83 = scmp.eq.s32.totalorder %s15, 0
      %p84 = por %p82, %p83
      %p85 = scmp.ne.s32.totalorder %s74, %s77
      %p86 = scmp.eq.s32.totalorder %s20, 1
      %p87 = por %p85, %p86
      %p88 = scmp.ne.s32.totalorder %s77, %s78
      %p89 = scmp.eq.s32.totalorder %s20, 0
      %p90 = por %p88, %p89
      %p91 = scmp.ne.s32.totalorder %s77, %s78
      %p92 = scmp.eq.s32.totalorder %s21, 1
      %p93 = por %p91, %p92
      %p95 = scmp.ne.s32.totalorder %s78, %s94
      %p96 = scmp.eq.s32.totalorder %s21, 0
      %p97 = por %p95, %p96
      %s98 = ssub.s32 %s22, %s41
      %s99 = ssub.s32 %s23, %s37
      %s100 = sor.u32 %s98, %s99
      %p101 = scmp.eq.s32.totalorder %s100, 0
      %s103 = sadd.s32 %s102, 1
      %s104 = scalar_select %p101, %s102, %s103
      %p107 = pneg %p101
      %p108 = scmp.eq.s32.totalorder %s15, 1
      %p109 = por %p107, %p108
      %p110 = scmp.ne.s32.totalorder %s102, %s105
      %p111 = scmp.eq.s32.totalorder %s15, 0
      %p112 = por %p110, %p111
      %p113 = scmp.ne.s32.totalorder %s102, %s105
      %p114 = scmp.eq.s32.totalorder %s20, 1
      %p115 = por %p113, %p114
      %p116 = scmp.ne.s32.totalorder %s105, %s106
      %p117 = scmp.eq.s32.totalorder %s20, 0
      %p118 = por %p116, %p117
      %p119 = scmp.ne.s32.totalorder %s105, %s106
      %p120 = scmp.eq.s32.totalorder %s21, 1
      %p121 = por %p119, %p120
      %p123 = scmp.ne.s32.totalorder %s106, %s122
      %p124 = scmp.eq.s32.totalorder %s21, 0
      %p125 = por %p123, %p124
      %p126 = scmp.le.s32.totalorder 1, %s15
      %p127 = scmp.lt.s32.totalorder %s15, 3
      %p128 = pnand %p126, %p127
      %p129 = pneg %p128
      // Predicated region
      $region9: #{norm_linear_product.1} parent=5 // pred_check
        _
      $region10: #{norm_linear_product.1} parent=5 // pred_check_branch
        %131 = sbr.rel (%p128) target = $region12
      $region11: #{norm_linear_product.1} parent=5 // pred_region
        %s132 = ssub.s32 %s15, 1
        // Predicated region
        $region13: #{norm_linear_product.1} parent=11 // pred_check
          %p133 = pneg %p62
        $region14: #{norm_linear_product.1} parent=11 // pred_check_branch
          %135 = sbr.rel (%p133) target = $region16
        $region15: #{norm_linear_product.1} parent=11 // pred_region
          %s136 = smul.u32 32, %s25
          %s137 = smul.u32 4, %s27
          %s139 = ssub.s32 16384, 16384
          %140 = vsyncadd [#allocation5], %s139
          %s141 = smul.addr %s136, 4
          %s142 = sadd.s32 %s137, %s141
          %s143 = smul.addr %s142, 128
          %s144 = scalar_lea.hbm %s0, %s143
          %s145 = sshll.u32 [#allocation4], 4
          %s146 = int_to_ptr.vmem [resolvable:$true] %s145
          %151 = dma.hbm_to_vmem [thread:$0]  %s144, 16384, %s146, [#allocation5], 512, 512, 32
        $region16: #{norm_linear_product.1} parent=11 // pred_fallthru
          _
      $region12: #{norm_linear_product.1} parent=5 // pred_fallthru
        _
      %p152 = scmp.lt.s32.totalorder %s15, 2
      // Predicated region
      $region17: #{norm_linear_product.1} parent=5 // pred_check
        %p153 = pneg %p152
      $region18: #{norm_linear_product.1} parent=5 // pred_check_branch
        %155 = sbr.rel (%p153) target = $region20
      $region19: #{norm_linear_product.1} parent=5 // pred_region
        // Predicated region
        $region21: #{norm_linear_product.1} parent=19 // pred_check
          %p156 = pneg %p84
        $region22: #{norm_linear_product.1} parent=19 // pred_check_branch
          %158 = sbr.rel (%p156) target = $region24
        $region23: #{norm_linear_product.1} parent=19 // pred_region
          %s159 = sand.u32 %s74, 1
          %s160 = scalar_lea.sflag [#allocation8], %s159
          %s161 = sand.u32 %s74, 1
          %s162 = smul.addr %s161, 1024
          %s163 = scalar_lea.vmem [#allocation7], %s162
          %s164 = smul.u32 32, %s23
          %s165 = smul.u32 4, %s24
          %s167 = ssub.s32 16384, 16384
          %168 = vsyncadd %s160, %s167
          %s169 = smul.addr %s164, 4
          %s170 = sadd.s32 %s165, %s169
          %s171 = smul.addr %s170, 128
          %s172 = scalar_lea.hbm %s1, %s171
          %s173 = sshll.u32 %s163, 4
          %s174 = int_to_ptr.vmem [resolvable:$true] %s173
          %179 = dma.hbm_to_vmem [thread:$0]  %s172, 16384, %s174, %s160, 512, 512, 32
        $region24: #{norm_linear_product.1} parent=19 // pred_fallthru
          _
      $region20: #{norm_linear_product.1} parent=5 // pred_fallthru
        _
      %p180 = scmp.le.s32.totalorder 1, %s15
      %p181 = scmp.lt.s32.totalorder %s15, 3
      %p182 = pnand %p180, %p181
      %p183 = pneg %p182
      // Predicated region
      $region25: #{norm_linear_product.1} parent=5 // pred_check
        _
      $region26: #{norm_linear_product.1} parent=5 // pred_check_branch
        %185 = sbr.rel (%p182) target = $region28
      $region27: #{norm_linear_product.1} parent=5 // pred_region
        %s186 = ssub.s32 %s15, 1
        // Predicated region
        $region29: #{norm_linear_product.1} parent=27 // pred_check
          %p187 = pneg %p62
        $region30: #{norm_linear_product.1} parent=27 // pred_check_branch
          %189 = sbr.rel (%p187) target = $region32
        $region31: #{norm_linear_product.1} parent=27 // pred_region
          %190 = dma.done [#allocation5], 16384
        $region32: #{norm_linear_product.1} parent=27 // pred_fallthru
          _
        %s191 = sand.u32 %s77, 1
        %s192 = scalar_lea.sflag [#allocation8], %s191
        %s193 = sand.u32 %s77, 1
        %s194 = smul.addr %s193, 1024
        %s195 = scalar_lea.vmem [#allocation7], %s194
        // Predicated region
        $region33: #{norm_linear_product.1} parent=27 // pred_check
          %p196 = pneg %p90
        $region34: #{norm_linear_product.1} parent=27 // pred_check_branch
          %198 = sbr.rel (%p196) target = $region36
        $region35: #{norm_linear_product.1} parent=27 // pred_region
          %199 = dma.done %s192, 16384
        $region36: #{norm_linear_product.1} parent=27 // pred_fallthru
          _
        %p200 = pneg %p62
        %p201 = pneg %p59
        %s202 = sand.u32 %s77, 1
        %s203 = scalar_lea.sflag [#allocation8], %s202
        %s204 = sand.u32 %s77, 1
        %s205 = smul.addr %s204, 1024
        %s206 = scalar_lea.vmem [#allocation7], %s205
        %p207 = pneg %p90
        %p208 = pneg %p87
        %p209 = pneg %p118
        %p210 = pneg %p115
        %s211 = sand.u32 %s105, 1
        %s212 = scalar_lea.sflag [#allocation6], %s211
        %s213 = sand.u32 %s105, 1
        %s214 = smul.addr %s213, 512
        %s215 = scalar_lea.vmem [#allocation9], %s214
        %s216 = smul.u32 32, %s25
        %s217 = smul.u32 4, %s27
        %s218 = smul.u32 32, %s26
        %s219 = smul.u32 4, %s27
        %s220 = smul.u32 32, %s25
        %s221 = smul.u32 2, %s26
        %p222 = scmp.eq.s32.totalorder %s27, 0
        // Predicated region
        $region37: #{norm_linear_product.1} parent=27 // pred_check
          %p223 = pneg %p222
        $region38: #{norm_linear_product.1} parent=27 // pred_check_branch
          %225 = sbr.rel (%p223) target = $region40
        $region39: #{norm_linear_product.1} parent=27 // pred_region
          %226 = vst [vmem:[%s215] sm:$0xff] 0.0
          %227 = vst [vmem:[%s215 + $0x8] sm:$0xff] 0.0
          %228 = vst [vmem:[%s215 + $0x10] sm:$0xff] 0.0
          %229 = vst [vmem:[%s215 + $0x18] sm:$0xff] 0.0
          %230 = vst [vmem:[%s215 + $0x20] sm:$0xff] 0.0
          %231 = vst [vmem:[%s215 + $0x28] sm:$0xff] 0.0
          %232 = vst [vmem:[%s215 + $0x30] sm:$0xff] 0.0
          %233 = vst [vmem:[%s215 + $0x38] sm:$0xff] 0.0
          %234 = vst [vmem:[%s215 + $0x40] sm:$0xff] 0.0
          %235 = vst [vmem:[%s215 + $0x48] sm:$0xff] 0.0
          %236 = vst [vmem:[%s215 + $0x50] sm:$0xff] 0.0
          %237 = vst [vmem:[%s215 + $0x58] sm:$0xff] 0.0
          %238 = vst [vmem:[%s215 + $0x60] sm:$0xff] 0.0
          %239 = vst [vmem:[%s215 + $0x68] sm:$0xff] 0.0
          %240 = vst [vmem:[%s215 + $0x70] sm:$0xff] 0.0
          %241 = vst [vmem:[%s215 + $0x78] sm:$0xff] 0.0
          %242 = vst [vmem:[%s215 + $0x80] sm:$0xff] 0.0
          %243 = vst [vmem:[%s215 + $0x88] sm:$0xff] 0.0
          %244 = vst [vmem:[%s215 + $0x90] sm:$0xff] 0.0
          %245 = vst [vmem:[%s215 + $0x98] sm:$0xff] 0.0
          %246 = vst [vmem:[%s215 + $0xa0] sm:$0xff] 0.0
          %247 = vst [vmem:[%s215 + $0xa8] sm:$0xff] 0.0
          %248 = vst [vmem:[%s215 + $0xb0] sm:$0xff] 0.0
          %249 = vst [vmem:[%s215 + $0xb8] sm:$0xff] 0.0
          %250 = vst [vmem:[%s215 + $0xc0] sm:$0xff] 0.0
          %251 = vst [vmem:[%s215 + $0xc8] sm:$0xff] 0.0
          %252 = vst [vmem:[%s215 + $0xd0] sm:$0xff] 0.0
          %253 = vst [vmem:[%s215 + $0xd8] sm:$0xff] 0.0
          %254 = vst [vmem:[%s215 + $0xe0] sm:$0xff] 0.0
          %255 = vst [vmem:[%s215 + $0xe8] sm:$0xff] 0.0
          %256 = vst [vmem:[%s215 + $0xf0] sm:$0xff] 0.0
          %257 = vst [vmem:[%s215 + $0xf8] sm:$0xff] 0.0
          %258 = vst [vmem:[%s215 + $0x100] sm:$0xff] 0.0
          %259 = vst [vmem:[%s215 + $0x108] sm:$0xff] 0.0
          %260 = vst [vmem:[%s215 + $0x110] sm:$0xff] 0.0
          %261 = vst [vmem:[%s215 + $0x118] sm:$0xff] 0.0
          %262 = vst [vmem:[%s215 + $0x120] sm:$0xff] 0.0
          %263 = vst [vmem:[%s215 + $0x128] sm:$0xff] 0.0
          %264 = vst [vmem:[%s215 + $0x130] sm:$0xff] 0.0
          %265 = vst [vmem:[%s215 + $0x138] sm:$0xff] 0.0
          %266 = vst [vmem:[%s215 + $0x140] sm:$0xff] 0.0
          %267 = vst [vmem:[%s215 + $0x148] sm:$0xff] 0.0
          %268 = vst [vmem:[%s215 + $0x150] sm:$0xff] 0.0
          %269 = vst [vmem:[%s215 + $0x158] sm:$0xff] 0.0
          %270 = vst [vmem:[%s215 + $0x160] sm:$0xff] 0.0
          %271 = vst [vmem:[%s215 + $0x168] sm:$0xff] 0.0
          %272 = vst [vmem:[%s215 + $0x170] sm:$0xff] 0.0
          %273 = vst [vmem:[%s215 + $0x178] sm:$0xff] 0.0
          %274 = vst [vmem:[%s215 + $0x180] sm:$0xff] 0.0
          %275 = vst [vmem:[%s215 + $0x188] sm:$0xff] 0.0
          %276 = vst [vmem:[%s215 + $0x190] sm:$0xff] 0.0
          %277 = vst [vmem:[%s215 + $0x198] sm:$0xff] 0.0
          %278 = vst [vmem:[%s215 + $0x1a0] sm:$0xff] 0.0
          %279 = vst [vmem:[%s215 + $0x1a8] sm:$0xff] 0.0
          %280 = vst [vmem:[%s215 + $0x1b0] sm:$0xff] 0.0
          %281 = vst [vmem:[%s215 + $0x1b8] sm:$0xff] 0.0
          %282 = vst [vmem:[%s215 + $0x1c0] sm:$0xff] 0.0
          %283 = vst [vmem:[%s215 + $0x1c8] sm:$0xff] 0.0
          %284 = vst [vmem:[%s215 + $0x1d0] sm:$0xff] 0.0
          %285 = vst [vmem:[%s215 + $0x1d8] sm:$0xff] 0.0
          %286 = vst [vmem:[%s215 + $0x1e0] sm:$0xff] 0.0
          %287 = vst [vmem:[%s215 + $0x1e8] sm:$0xff] 0.0
          %288 = vst [vmem:[%s215 + $0x1f0] sm:$0xff] 0.0
          %289 = vst [vmem:[%s215 + $0x1f8] sm:$0xff] 0.0
          %vm290 = vcmask 7168
          %291 = vst.msk [vmem:[#allocation2] sm:$0xff] %vm290, 0.0
          %292 = vst.msk [vmem:[#allocation2 + $0x8] sm:$0xff] %vm290, 0.0
          %293 = vst.msk [vmem:[#allocation2 + $0x10] sm:$0xff] %vm290, 0.0
          %294 = vst.msk [vmem:[#allocation2 + $0x18] sm:$0xff] %vm290, 0.0
          %295 = vst.msk [vmem:[#allocation2 + $0x20] sm:$0xff] %vm290, 0.0
          %296 = vst.msk [vmem:[#allocation2 + $0x28] sm:$0xff] %vm290, 0.0
          %297 = vst.msk [vmem:[#allocation2 + $0x30] sm:$0xff] %vm290, 0.0
          %298 = vst.msk [vmem:[#allocation2 + $0x38] sm:$0xff] %vm290, 0.0
          %299 = vst.msk [vmem:[#allocation2 + $0x40] sm:$0xff] %vm290, 0.0
          %300 = vst.msk [vmem:[#allocation2 + $0x48] sm:$0xff] %vm290, 0.0
          %301 = vst.msk [vmem:[#allocation2 + $0x50] sm:$0xff] %vm290, 0.0
          %302 = vst.msk [vmem:[#allocation2 + $0x58] sm:$0xff] %vm290, 0.0
          %303 = vst.msk [vmem:[#allocation2 + $0x60] sm:$0xff] %vm290, 0.0
          %304 = vst.msk [vmem:[#allocation2 + $0x68] sm:$0xff] %vm290, 0.0
          %305 = vst.msk [vmem:[#allocation2 + $0x70] sm:$0xff] %vm290, 0.0
          %306 = vst.msk [vmem:[#allocation2 + $0x78] sm:$0xff] %vm290, 0.0
          %307 = vst.msk [vmem:[#allocation2 + $0x80] sm:$0xff] %vm290, 0.0
          %308 = vst.msk [vmem:[#allocation2 + $0x88] sm:$0xff] %vm290, 0.0
          %309 = vst.msk [vmem:[#allocation2 + $0x90] sm:$0xff] %vm290, 0.0
          %310 = vst.msk [vmem:[#allocation2 + $0x98] sm:$0xff] %vm290, 0.0
          %311 = vst.msk [vmem:[#allocation2 + $0xa0] sm:$0xff] %vm290, 0.0
          %312 = vst.msk [vmem:[#allocation2 + $0xa8] sm:$0xff] %vm290, 0.0
          %313 = vst.msk [vmem:[#allocation2 + $0xb0] sm:$0xff] %vm290, 0.0
          %314 = vst.msk [vmem:[#allocation2 + $0xb8] sm:$0xff] %vm290, 0.0
          %315 = vst.msk [vmem:[#allocation2 + $0xc0] sm:$0xff] %vm290, 0.0
          %316 = vst.msk [vmem:[#allocation2 + $0xc8] sm:$0xff] %vm290, 0.0
          %317 = vst.msk [vmem:[#allocation2 + $0xd0] sm:$0xff] %vm290, 0.0
          %318 = vst.msk [vmem:[#allocation2 + $0xd8] sm:$0xff] %vm290, 0.0
          %319 = vst.msk [vmem:[#allocation2 + $0xe0] sm:$0xff] %vm290, 0.0
          %320 = vst.msk [vmem:[#allocation2 + $0xe8] sm:$0xff] %vm290, 0.0
          %321 = vst.msk [vmem:[#allocation2 + $0xf0] sm:$0xff] %vm290, 0.0
          %322 = vst.msk [vmem:[#allocation2 + $0xf8] sm:$0xff] %vm290, 0.0
          %323 = vst [vmem:[#allocation3] sm:$0xff] 0.0
          %324 = vst [vmem:[#allocation3 + $0x8] sm:$0xff] 0.0
        $region40: #{norm_linear_product.1} parent=27 // pred_fallthru
          _
        %v325 = vld [vmem:[#allocation4] sm:$0xff]
        %v326 = vld [vmem:[#allocation4 + $0x8] sm:$0xff]
        %v327 = vld [vmem:[#allocation4 + $0x10] sm:$0xff]
        %v328 = vld [vmem:[#allocation4 + $0x18] sm:$0xff]
        %v329 = vld [vmem:[#allocation4 + $0x20] sm:$0xff]
        %v330 = vld [vmem:[#allocation4 + $0x28] sm:$0xff]
        %v331 = vld [vmem:[#allocation4 + $0x30] sm:$0xff]
        %v332 = vld [vmem:[#allocation4 + $0x38] sm:$0xff]
        %v333 = vld [vmem:[#allocation4 + $0x40] sm:$0xff]
        %v334 = vld [vmem:[#allocation4 + $0x48] sm:$0xff]
        %v335 = vld [vmem:[#allocation4 + $0x50] sm:$0xff]
        %v336 = vld [vmem:[#allocation4 + $0x58] sm:$0xff]
        %v337 = vld [vmem:[#allocation4 + $0x60] sm:$0xff]
        %v338 = vld [vmem:[#allocation4 + $0x68] sm:$0xff]
        %v339 = vld [vmem:[#allocation4 + $0x70] sm:$0xff]
        %v340 = vld [vmem:[#allocation4 + $0x78] sm:$0xff]
        %v341 = vld [vmem:[#allocation4 + $0x80] sm:$0xff]
        %v342 = vld [vmem:[#allocation4 + $0x88] sm:$0xff]
        %v343 = vld [vmem:[#allocation4 + $0x90] sm:$0xff]
        %v344 = vld [vmem:[#allocation4 + $0x98] sm:$0xff]
        %v345 = vld [vmem:[#allocation4 + $0xa0] sm:$0xff]
        %v346 = vld [vmem:[#allocation4 + $0xa8] sm:$0xff]
        %v347 = vld [vmem:[#allocation4 + $0xb0] sm:$0xff]
        %v348 = vld [vmem:[#allocation4 + $0xb8] sm:$0xff]
        %v349 = vld [vmem:[#allocation4 + $0xc0] sm:$0xff]
        %v350 = vld [vmem:[#allocation4 + $0xc8] sm:$0xff]
        %v351 = vld [vmem:[#allocation4 + $0xd0] sm:$0xff]
        %v352 = vld [vmem:[#allocation4 + $0xd8] sm:$0xff]
        %v353 = vld [vmem:[#allocation4 + $0xe0] sm:$0xff]
        %v354 = vld [vmem:[#allocation4 + $0xe8] sm:$0xff]
        %v355 = vld [vmem:[#allocation4 + $0xf0] sm:$0xff]
        %v356 = vld [vmem:[#allocation4 + $0xf8] sm:$0xff]
        %v357 = vld [vmem:[#allocation4 + $0x100] sm:$0xff]
        %v358 = vld [vmem:[#allocation4 + $0x108] sm:$0xff]
        %v359 = vld [vmem:[#allocation4 + $0x110] sm:$0xff]
        %v360 = vld [vmem:[#allocation4 + $0x118] sm:$0xff]
        %v361 = vld [vmem:[#allocation4 + $0x120] sm:$0xff]
        %v362 = vld [vmem:[#allocation4 + $0x128] sm:$0xff]
        %v363 = vld [vmem:[#allocation4 + $0x130] sm:$0xff]
        %v364 = vld [vmem:[#allocation4 + $0x138] sm:$0xff]
        %v365 = vld [vmem:[#allocation4 + $0x140] sm:$0xff]
        %v366 = vld [vmem:[#allocation4 + $0x148] sm:$0xff]
        %v367 = vld [vmem:[#allocation4 + $0x150] sm:$0xff]
        %v368 = vld [vmem:[#allocation4 + $0x158] sm:$0xff]
        %v369 = vld [vmem:[#allocation4 + $0x160] sm:$0xff]
        %v370 = vld [vmem:[#allocation4 + $0x168] sm:$0xff]
        %v371 = vld [vmem:[#allocation4 + $0x170] sm:$0xff]
        %v372 = vld [vmem:[#allocation4 + $0x178] sm:$0xff]
        %v373 = vld [vmem:[#allocation4 + $0x180] sm:$0xff]
        %v374 = vld [vmem:[#allocation4 + $0x188] sm:$0xff]
        %v375 = vld [vmem:[#allocation4 + $0x190] sm:$0xff]
        %v376 = vld [vmem:[#allocation4 + $0x198] sm:$0xff]
        %v377 = vld [vmem:[#allocation4 + $0x1a0] sm:$0xff]
        %v378 = vld [vmem:[#allocation4 + $0x1a8] sm:$0xff]
        %v379 = vld [vmem:[#allocation4 + $0x1b0] sm:$0xff]
        %v380 = vld [vmem:[#allocation4 + $0x1b8] sm:$0xff]
        %v381 = vld [vmem:[#allocation4 + $0x1c0] sm:$0xff]
        %v382 = vld [vmem:[#allocation4 + $0x1c8] sm:$0xff]
        %v383 = vld [vmem:[#allocation4 + $0x1d0] sm:$0xff]
        %v384 = vld [vmem:[#allocation4 + $0x1d8] sm:$0xff]
        %v385 = vld [vmem:[#allocation4 + $0x1e0] sm:$0xff]
        %v386 = vld [vmem:[#allocation4 + $0x1e8] sm:$0xff]
        %v387 = vld [vmem:[#allocation4 + $0x1f0] sm:$0xff]
        %v388 = vld [vmem:[#allocation4 + $0x1f8] sm:$0xff]
        %v389 = vld [vmem:[#allocation4 + $0x200] sm:$0xff]
        %v390 = vld [vmem:[#allocation4 + $0x208] sm:$0xff]
        %v391 = vld [vmem:[#allocation4 + $0x210] sm:$0xff]
        %v392 = vld [vmem:[#allocation4 + $0x218] sm:$0xff]
        %v393 = vld [vmem:[#allocation4 + $0x220] sm:$0xff]
        %v394 = vld [vmem:[#allocation4 + $0x228] sm:$0xff]
        %v395 = vld [vmem:[#allocation4 + $0x230] sm:$0xff]
        %v396 = vld [vmem:[#allocation4 + $0x238] sm:$0xff]
        %v397 = vld [vmem:[#allocation4 + $0x240] sm:$0xff]
        %v398 = vld [vmem:[#allocation4 + $0x248] sm:$0xff]
        %v399 = vld [vmem:[#allocation4 + $0x250] sm:$0xff]
        %v400 = vld [vmem:[#allocation4 + $0x258] sm:$0xff]
        %v401 = vld [vmem:[#allocation4 + $0x260] sm:$0xff]
        %v402 = vld [vmem:[#allocation4 + $0x268] sm:$0xff]
        %v403 = vld [vmem:[#allocation4 + $0x270] sm:$0xff]
        %v404 = vld [vmem:[#allocation4 + $0x278] sm:$0xff]
        %v405 = vld [vmem:[#allocation4 + $0x280] sm:$0xff]
        %v406 = vld [vmem:[#allocation4 + $0x288] sm:$0xff]
        %v407 = vld [vmem:[#allocation4 + $0x290] sm:$0xff]
        %v408 = vld [vmem:[#allocation4 + $0x298] sm:$0xff]
        %v409 = vld [vmem:[#allocation4 + $0x2a0] sm:$0xff]
        %v410 = vld [vmem:[#allocation4 + $0x2a8] sm:$0xff]
        %v411 = vld [vmem:[#allocation4 + $0x2b0] sm:$0xff]
        %v412 = vld [vmem:[#allocation4 + $0x2b8] sm:$0xff]
        %v413 = vld [vmem:[#allocation4 + $0x2c0] sm:$0xff]
        %v414 = vld [vmem:[#allocation4 + $0x2c8] sm:$0xff]
        %v415 = vld [vmem:[#allocation4 + $0x2d0] sm:$0xff]
        %v416 = vld [vmem:[#allocation4 + $0x2d8] sm:$0xff]
        %v417 = vld [vmem:[#allocation4 + $0x2e0] sm:$0xff]
        %v418 = vld [vmem:[#allocation4 + $0x2e8] sm:$0xff]
        %v419 = vld [vmem:[#allocation4 + $0x2f0] sm:$0xff]
        %v420 = vld [vmem:[#allocation4 + $0x2f8] sm:$0xff]
        %v421 = vld [vmem:[#allocation4 + $0x300] sm:$0xff]
        %v422 = vld [vmem:[#allocation4 + $0x308] sm:$0xff]
        %v423 = vld [vmem:[#allocation4 + $0x310] sm:$0xff]
        %v424 = vld [vmem:[#allocation4 + $0x318] sm:$0xff]
        %v425 = vld [vmem:[#allocation4 + $0x320] sm:$0xff]
        %v426 = vld [vmem:[#allocation4 + $0x328] sm:$0xff]
        %v427 = vld [vmem:[#allocation4 + $0x330] sm:$0xff]
        %v428 = vld [vmem:[#allocation4 + $0x338] sm:$0xff]
        %v429 = vld [vmem:[#allocation4 + $0x340] sm:$0xff]
        %v430 = vld [vmem:[#allocation4 + $0x348] sm:$0xff]
        %v431 = vld [vmem:[#allocation4 + $0x350] sm:$0xff]
        %v432 = vld [vmem:[#allocation4 + $0x358] sm:$0xff]
        %v433 = vld [vmem:[#allocation4 + $0x360] sm:$0xff]
        %v434 = vld [vmem:[#allocation4 + $0x368] sm:$0xff]
        %v435 = vld [vmem:[#allocation4 + $0x370] sm:$0xff]
        %v436 = vld [vmem:[#allocation4 + $0x378] sm:$0xff]
        %v437 = vld [vmem:[#allocation4 + $0x380] sm:$0xff]
        %v438 = vld [vmem:[#allocation4 + $0x388] sm:$0xff]
        %v439 = vld [vmem:[#allocation4 + $0x390] sm:$0xff]
        %v440 = vld [vmem:[#allocation4 + $0x398] sm:$0xff]
        %v441 = vld [vmem:[#allocation4 + $0x3a0] sm:$0xff]
        %v442 = vld [vmem:[#allocation4 + $0x3a8] sm:$0xff]
        %v443 = vld [vmem:[#allocation4 + $0x3b0] sm:$0xff]
        %v444 = vld [vmem:[#allocation4 + $0x3b8] sm:$0xff]
        %v445 = vld [vmem:[#allocation4 + $0x3c0] sm:$0xff]
        %v446 = vld [vmem:[#allocation4 + $0x3c8] sm:$0xff]
        %v447 = vld [vmem:[#allocation4 + $0x3d0] sm:$0xff]
        %v448 = vld [vmem:[#allocation4 + $0x3d8] sm:$0xff]
        %v449 = vld [vmem:[#allocation4 + $0x3e0] sm:$0xff]
        %v450 = vld [vmem:[#allocation4 + $0x3e8] sm:$0xff]
        %v451 = vld [vmem:[#allocation4 + $0x3f0] sm:$0xff]
        %v452 = vld [vmem:[#allocation4 + $0x3f8] sm:$0xff]
        %v453 = vld [vmem:[%s195] sm:$0xff]
        %v454 = vld [vmem:[%s195 + $0x8] sm:$0xff]
        %v455 = vld [vmem:[%s195 + $0x10] sm:$0xff]
        %v456 = vld [vmem:[%s195 + $0x18] sm:$0xff]
        %v457 = vld [vmem:[%s195 + $0x20] sm:$0xff]
        %v458 = vld [vmem:[%s195 + $0x28] sm:$0xff]
        %v459 = vld [vmem:[%s195 + $0x30] sm:$0xff]
        %v460 = vld [vmem:[%s195 + $0x38] sm:$0xff]
        %v461 = vld [vmem:[%s195 + $0x40] sm:$0xff]
        %v462 = vld [vmem:[%s195 + $0x48] sm:$0xff]
        %v463 = vld [vmem:[%s195 + $0x50] sm:$0xff]
        %v464 = vld [vmem:[%s195 + $0x58] sm:$0xff]
        %v465 = vld [vmem:[%s195 + $0x60] sm:$0xff]
        %v466 = vld [vmem:[%s195 + $0x68] sm:$0xff]
        %v467 = vld [vmem:[%s195 + $0x70] sm:$0xff]
        %v468 = vld [vmem:[%s195 + $0x78] sm:$0xff]
        %v469 = vld [vmem:[%s195 + $0x80] sm:$0xff]
        %v470 = vld [vmem:[%s195 + $0x88] sm:$0xff]
        %v471 = vld [vmem:[%s195 + $0x90] sm:$0xff]
        %v472 = vld [vmem:[%s195 + $0x98] sm:$0xff]
        %v473 = vld [vmem:[%s195 + $0xa0] sm:$0xff]
        %v474 = vld [vmem:[%s195 + $0xa8] sm:$0xff]
        %v475 = vld [vmem:[%s195 + $0xb0] sm:$0xff]
        %v476 = vld [vmem:[%s195 + $0xb8] sm:$0xff]
        %v477 = vld [vmem:[%s195 + $0xc0] sm:$0xff]
        %v478 = vld [vmem:[%s195 + $0xc8] sm:$0xff]
        %v479 = vld [vmem:[%s195 + $0xd0] sm:$0xff]
        %v480 = vld [vmem:[%s195 + $0xd8] sm:$0xff]
        %v481 = vld [vmem:[%s195 + $0xe0] sm:$0xff]
        %v482 = vld [vmem:[%s195 + $0xe8] sm:$0xff]
        %v483 = vld [vmem:[%s195 + $0xf0] sm:$0xff]
        %v484 = vld [vmem:[%s195 + $0xf8] sm:$0xff]
        %v485 = vld [vmem:[%s195 + $0x100] sm:$0xff]
        %v486 = vld [vmem:[%s195 + $0x108] sm:$0xff]
        %v487 = vld [vmem:[%s195 + $0x110] sm:$0xff]
        %v488 = vld [vmem:[%s195 + $0x118] sm:$0xff]
        %v489 = vld [vmem:[%s195 + $0x120] sm:$0xff]
        %v490 = vld [vmem:[%s195 + $0x128] sm:$0xff]
        %v491 = vld [vmem:[%s195 + $0x130] sm:$0xff]
        %v492 = vld [vmem:[%s195 + $0x138] sm:$0xff]
        %v493 = vld [vmem:[%s195 + $0x140] sm:$0xff]
        %v494 = vld [vmem:[%s195 + $0x148] sm:$0xff]
        %v495 = vld [vmem:[%s195 + $0x150] sm:$0xff]
        %v496 = vld [vmem:[%s195 + $0x158] sm:$0xff]
        %v497 = vld [vmem:[%s195 + $0x160] sm:$0xff]
        %v498 = vld [vmem:[%s195 + $0x168] sm:$0xff]
        %v499 = vld [vmem:[%s195 + $0x170] sm:$0xff]
        %v500 = vld [vmem:[%s195 + $0x178] sm:$0xff]
        %v501 = vld [vmem:[%s195 + $0x180] sm:$0xff]
        %v502 = vld [vmem:[%s195 + $0x188] sm:$0xff]
        %v503 = vld [vmem:[%s195 + $0x190] sm:$0xff]
        %v504 = vld [vmem:[%s195 + $0x198] sm:$0xff]
        %v505 = vld [vmem:[%s195 + $0x1a0] sm:$0xff]
        %v506 = vld [vmem:[%s195 + $0x1a8] sm:$0xff]
        %v507 = vld [vmem:[%s195 + $0x1b0] sm:$0xff]
        %v508 = vld [vmem:[%s195 + $0x1b8] sm:$0xff]
        %v509 = vld [vmem:[%s195 + $0x1c0] sm:$0xff]
        %v510 = vld [vmem:[%s195 + $0x1c8] sm:$0xff]
        %v511 = vld [vmem:[%s195 + $0x1d0] sm:$0xff]
        %v512 = vld [vmem:[%s195 + $0x1d8] sm:$0xff]
        %v513 = vld [vmem:[%s195 + $0x1e0] sm:$0xff]
        %v514 = vld [vmem:[%s195 + $0x1e8] sm:$0xff]
        %v515 = vld [vmem:[%s195 + $0x1f0] sm:$0xff]
        %v516 = vld [vmem:[%s195 + $0x1f8] sm:$0xff]
        %v517 = vld [vmem:[%s195 + $0x200] sm:$0xff]
        %v518 = vld [vmem:[%s195 + $0x208] sm:$0xff]
        %v519 = vld [vmem:[%s195 + $0x210] sm:$0xff]
        %v520 = vld [vmem:[%s195 + $0x218] sm:$0xff]
        %v521 = vld [vmem:[%s195 + $0x220] sm:$0xff]
        %v522 = vld [vmem:[%s195 + $0x228] sm:$0xff]
        %v523 = vld [vmem:[%s195 + $0x230] sm:$0xff]
        %v524 = vld [vmem:[%s195 + $0x238] sm:$0xff]
        %v525 = vld [vmem:[%s195 + $0x240] sm:$0xff]
        %v526 = vld [vmem:[%s195 + $0x248] sm:$0xff]
        %v527 = vld [vmem:[%s195 + $0x250] sm:$0xff]
        %v528 = vld [vmem:[%s195 + $0x258] sm:$0xff]
        %v529 = vld [vmem:[%s195 + $0x260] sm:$0xff]
        %v530 = vld [vmem:[%s195 + $0x268] sm:$0xff]
        %v531 = vld [vmem:[%s195 + $0x270] sm:$0xff]
        %v532 = vld [vmem:[%s195 + $0x278] sm:$0xff]
        %v533 = vld [vmem:[%s195 + $0x280] sm:$0xff]
        %v534 = vld [vmem:[%s195 + $0x288] sm:$0xff]
        %v535 = vld [vmem:[%s195 + $0x290] sm:$0xff]
        %v536 = vld [vmem:[%s195 + $0x298] sm:$0xff]
        %v537 = vld [vmem:[%s195 + $0x2a0] sm:$0xff]
        %v538 = vld [vmem:[%s195 + $0x2a8] sm:$0xff]
        %v539 = vld [vmem:[%s195 + $0x2b0] sm:$0xff]
        %v540 = vld [vmem:[%s195 + $0x2b8] sm:$0xff]
        %v541 = vld [vmem:[%s195 + $0x2c0] sm:$0xff]
        %v542 = vld [vmem:[%s195 + $0x2c8] sm:$0xff]
        %v543 = vld [vmem:[%s195 + $0x2d0] sm:$0xff]
        %v544 = vld [vmem:[%s195 + $0x2d8] sm:$0xff]
        %v545 = vld [vmem:[%s195 + $0x2e0] sm:$0xff]
        %v546 = vld [vmem:[%s195 + $0x2e8] sm:$0xff]
        %v547 = vld [vmem:[%s195 + $0x2f0] sm:$0xff]
        %v548 = vld [vmem:[%s195 + $0x2f8] sm:$0xff]
        %v549 = vld [vmem:[%s195 + $0x300] sm:$0xff]
        %v550 = vld [vmem:[%s195 + $0x308] sm:$0xff]
        %v551 = vld [vmem:[%s195 + $0x310] sm:$0xff]
        %v552 = vld [vmem:[%s195 + $0x318] sm:$0xff]
        %v553 = vld [vmem:[%s195 + $0x320] sm:$0xff]
        %v554 = vld [vmem:[%s195 + $0x328] sm:$0xff]
        %v555 = vld [vmem:[%s195 + $0x330] sm:$0xff]
        %v556 = vld [vmem:[%s195 + $0x338] sm:$0xff]
        %v557 = vld [vmem:[%s195 + $0x340] sm:$0xff]
        %v558 = vld [vmem:[%s195 + $0x348] sm:$0xff]
        %v559 = vld [vmem:[%s195 + $0x350] sm:$0xff]
        %v560 = vld [vmem:[%s195 + $0x358] sm:$0xff]
        %v561 = vld [vmem:[%s195 + $0x360] sm:$0xff]
        %v562 = vld [vmem:[%s195 + $0x368] sm:$0xff]
        %v563 = vld [vmem:[%s195 + $0x370] sm:$0xff]
        %v564 = vld [vmem:[%s195 + $0x378] sm:$0xff]
        %v565 = vld [vmem:[%s195 + $0x380] sm:$0xff]
        %v566 = vld [vmem:[%s195 + $0x388] sm:$0xff]
        %v567 = vld [vmem:[%s195 + $0x390] sm:$0xff]
        %v568 = vld [vmem:[%s195 + $0x398] sm:$0xff]
        %v569 = vld [vmem:[%s195 + $0x3a0] sm:$0xff]
        %v570 = vld [vmem:[%s195 + $0x3a8] sm:$0xff]
        %v571 = vld [vmem:[%s195 + $0x3b0] sm:$0xff]
        %v572 = vld [vmem:[%s195 + $0x3b8] sm:$0xff]
        %v573 = vld [vmem:[%s195 + $0x3c0] sm:$0xff]
        %v574 = vld [vmem:[%s195 + $0x3c8] sm:$0xff]
        %v575 = vld [vmem:[%s195 + $0x3d0] sm:$0xff]
        %v576 = vld [vmem:[%s195 + $0x3d8] sm:$0xff]
        %v577 = vld [vmem:[%s195 + $0x3e0] sm:$0xff]
        %v578 = vld [vmem:[%s195 + $0x3e8] sm:$0xff]
        %v579 = vld [vmem:[%s195 + $0x3f0] sm:$0xff]
        %v580 = vld [vmem:[%s195 + $0x3f8] sm:$0xff]
        %v581 = vld [vmem:[%s215] sm:$0xff]
        %v582 = vld [vmem:[%s215 + $0x8] sm:$0xff]
        %v583 = vld [vmem:[%s215 + $0x10] sm:$0xff]
        %v584 = vld [vmem:[%s215 + $0x18] sm:$0xff]
        %v585 = vld [vmem:[%s215 + $0x20] sm:$0xff]
        %v586 = vld [vmem:[%s215 + $0x28] sm:$0xff]
        %v587 = vld [vmem:[%s215 + $0x30] sm:$0xff]
        %v588 = vld [vmem:[%s215 + $0x38] sm:$0xff]
        %v589 = vld [vmem:[%s215 + $0x40] sm:$0xff]
        %v590 = vld [vmem:[%s215 + $0x48] sm:$0xff]
        %v591 = vld [vmem:[%s215 + $0x50] sm:$0xff]
        %v592 = vld [vmem:[%s215 + $0x58] sm:$0xff]
        %v593 = vld [vmem:[%s215 + $0x60] sm:$0xff]
        %v594 = vld [vmem:[%s215 + $0x68] sm:$0xff]
        %v595 = vld [vmem:[%s215 + $0x70] sm:$0xff]
        %v596 = vld [vmem:[%s215 + $0x78] sm:$0xff]
        %v597 = vld [vmem:[%s215 + $0x80] sm:$0xff]
        %v598 = vld [vmem:[%s215 + $0x88] sm:$0xff]
        %v599 = vld [vmem:[%s215 + $0x90] sm:$0xff]
        %v600 = vld [vmem:[%s215 + $0x98] sm:$0xff]
        %v601 = vld [vmem:[%s215 + $0xa0] sm:$0xff]
        %v602 = vld [vmem:[%s215 + $0xa8] sm:$0xff]
        %v603 = vld [vmem:[%s215 + $0xb0] sm:$0xff]
        %v604 = vld [vmem:[%s215 + $0xb8] sm:$0xff]
        %v605 = vld [vmem:[%s215 + $0xc0] sm:$0xff]
        %v606 = vld [vmem:[%s215 + $0xc8] sm:$0xff]
        %v607 = vld [vmem:[%s215 + $0xd0] sm:$0xff]
        %v608 = vld [vmem:[%s215 + $0xd8] sm:$0xff]
        %v609 = vld [vmem:[%s215 + $0xe0] sm:$0xff]
        %v610 = vld [vmem:[%s215 + $0xe8] sm:$0xff]
        %v611 = vld [vmem:[%s215 + $0xf0] sm:$0xff]
        %v612 = vld [vmem:[%s215 + $0xf8] sm:$0xff]
        %v613 = vld [vmem:[%s215 + $0x100] sm:$0xff]
        %v614 = vld [vmem:[%s215 + $0x108] sm:$0xff]
        %v615 = vld [vmem:[%s215 + $0x110] sm:$0xff]
        %v616 = vld [vmem:[%s215 + $0x118] sm:$0xff]
        %v617 = vld [vmem:[%s215 + $0x120] sm:$0xff]
        %v618 = vld [vmem:[%s215 + $0x128] sm:$0xff]
        %v619 = vld [vmem:[%s215 + $0x130] sm:$0xff]
        %v620 = vld [vmem:[%s215 + $0x138] sm:$0xff]
        %v621 = vld [vmem:[%s215 + $0x140] sm:$0xff]
        %v622 = vld [vmem:[%s215 + $0x148] sm:$0xff]
        %v623 = vld [vmem:[%s215 + $0x150] sm:$0xff]
        %v624 = vld [vmem:[%s215 + $0x158] sm:$0xff]
        %v625 = vld [vmem:[%s215 + $0x160] sm:$0xff]
        %v626 = vld [vmem:[%s215 + $0x168] sm:$0xff]
        %v627 = vld [vmem:[%s215 + $0x170] sm:$0xff]
        %v628 = vld [vmem:[%s215 + $0x178] sm:$0xff]
        %v629 = vld [vmem:[%s215 + $0x180] sm:$0xff]
        %v630 = vld [vmem:[%s215 + $0x188] sm:$0xff]
        %v631 = vld [vmem:[%s215 + $0x190] sm:$0xff]
        %v632 = vld [vmem:[%s215 + $0x198] sm:$0xff]
        %v633 = vld [vmem:[%s215 + $0x1a0] sm:$0xff]
        %v634 = vld [vmem:[%s215 + $0x1a8] sm:$0xff]
        %v635 = vld [vmem:[%s215 + $0x1b0] sm:$0xff]
        %v636 = vld [vmem:[%s215 + $0x1b8] sm:$0xff]
        %v637 = vld [vmem:[%s215 + $0x1c0] sm:$0xff]
        %v638 = vld [vmem:[%s215 + $0x1c8] sm:$0xff]
        %v639 = vld [vmem:[%s215 + $0x1d0] sm:$0xff]
        %v640 = vld [vmem:[%s215 + $0x1d8] sm:$0xff]
        %v641 = vld [vmem:[%s215 + $0x1e0] sm:$0xff]
        %v642 = vld [vmem:[%s215 + $0x1e8] sm:$0xff]
        %v643 = vld [vmem:[%s215 + $0x1f0] sm:$0xff]
        %v644 = vld [vmem:[%s215 + $0x1f8] sm:$0xff]
        %645 = vmatprep.subr.mxu0 %v454
        %646 = vmatpush1.xpose.msra.mxu0 %v453
        %647 = vmatprep.subr.mxu0 %v458
        %648 = vmatpush1.xpose.msra.mxu0 %v457
        %649 = vmatprep.subr.mxu0 %v462
        %650 = vmatpush1.xpose.msra.mxu0 %v461
        %651 = vmatprep.subr.mxu0 %v466
        %652 = vmatpush1.xpose.msra.mxu0 %v465
        %653 = vmatprep.subr.mxu0 %v470
        %654 = vmatpush1.xpose.msra.mxu0 %v469
        %655 = vmatprep.subr.mxu0 %v474
        %656 = vmatpush1.xpose.msra.mxu0 %v473
        %657 = vmatprep.subr.mxu0 %v478
        %658 = vmatpush1.xpose.msra.mxu0 %v477
        %659 = vmatprep.subr.mxu0 %v482
        %660 = vmatpush1.xpose.msra.mxu0 %v481
        %661 = vmatprep.subr.mxu0 %v486
        %662 = vmatpush1.xpose.msra.mxu0 %v485
        %663 = vmatprep.subr.mxu0 %v490
        %664 = vmatpush1.xpose.msra.mxu0 %v489
        %665 = vmatprep.subr.mxu0 %v494
        %666 = vmatpush1.xpose.msra.mxu0 %v493
        %667 = vmatprep.subr.mxu0 %v498
        %668 = vmatpush1.xpose.msra.mxu0 %v497
        %669 = vmatprep.subr.mxu0 %v502
        %670 = vmatpush1.xpose.msra.mxu0 %v501
        %671 = vmatprep.subr.mxu0 %v506
        %672 = vmatpush1.xpose.msra.mxu0 %v505
        %673 = vmatprep.subr.mxu0 %v510
        %674 = vmatpush1.xpose.msra.mxu0 %v509
        %675 = vmatprep.subr.mxu0 %v514
        %676 = vmatpush1.xpose.msra.mxu0 %v513
        %677 = vmatprep.subr.mxu0 %v518
        %678 = vmatpush1.xpose.msra.mxu0 %v517
        %679 = vmatprep.subr.mxu0 %v522
        %680 = vmatpush1.xpose.msra.mxu0 %v521
        %681 = vmatprep.subr.mxu0 %v526
        %682 = vmatpush1.xpose.msra.mxu0 %v525
        %683 = vmatprep.subr.mxu0 %v530
        %684 = vmatpush1.xpose.msra.mxu0 %v529
        %685 = vmatprep.subr.mxu0 %v534
        %686 = vmatpush1.xpose.msra.mxu0 %v533
        %687 = vmatprep.subr.mxu0 %v538
        %688 = vmatpush1.xpose.msra.mxu0 %v537
        %689 = vmatprep.subr.mxu0 %v542
        %690 = vmatpush1.xpose.msra.mxu0 %v541
        %691 = vmatprep.subr.mxu0 %v546
        %692 = vmatpush1.xpose.msra.mxu0 %v545
        %693 = vmatprep.subr.mxu0 %v550
        %694 = vmatpush1.xpose.msra.mxu0 %v549
        %695 = vmatprep.subr.mxu0 %v554
        %696 = vmatpush1.xpose.msra.mxu0 %v553
        %697 = vmatprep.subr.mxu0 %v558
        %698 = vmatpush1.xpose.msra.mxu0 %v557
        %699 = vmatprep.subr.mxu0 %v562
        %700 = vmatpush1.xpose.msra.mxu0 %v561
        %701 = vmatprep.subr.mxu0 %v566
        %702 = vmatpush1.xpose.msra.mxu0 %v565
        %703 = vmatprep.subr.mxu0 %v570
        %704 = vmatpush1.xpose.msra.mxu0 %v569
        %705 = vmatprep.subr.mxu0 %v574
        %706 = vmatpush1.xpose.msra.mxu0 %v573
        %707 = vmatprep.subr.mxu0 %v578
        %708 = vmatpush1.xpose.msra.mxu0 %v577
        %709 = vmatprep.mubr.f32.mxu0 %v326
        %710 = vmatmul.mubr.f32.gmra.mrb[0].mxu0 %v325
        %v711 = vpop.f32.mrb[0].mxu0
        %v712 = vadd.f32 0.0, %v711
        %v713 = vpop.f32.mrb[0].mxu0
        %v714 = vadd.f32 0.0, %v713
        %715 = vmatprep.mubr.f32.mxu0 %v330
        %716 = vmatmul.mubr.f32.gmra.mrb[0].mxu0 %v329
        %v717 = vpop.f32.mrb[0].mxu0
        %v718 = vadd.f32 0.0, %v717
        %v719 = vpop.f32.mrb[0].mxu0
        %v720 = vadd.f32 0.0, %v719
        %721 = vmatprep.mubr.f32.mxu0 %v334
        %722 = vmatmul.mubr.f32.gmra.mrb[0].mxu0 %v333
        %v723 = vpop.f32.mrb[0].mxu0
        %v724 = vadd.f32 0.0, %v723
        %v725 = vpop.f32.mrb[0].mxu0
        %v726 = vadd.f32 0.0, %v725
        %727 = vmatprep.mubr.f32.mxu0 %v338
        %728 = vmatmul.mubr.f32.gmra.mrb[0].mxu0 %v337
        %v729 = vpop.f32.mrb[0].mxu0
        %v730 = vadd.f32 0.0, %v729
        %v731 = vpop.f32.mrb[0].mxu0
        %v732 = vadd.f32 0.0, %v731
        %733 = vmatprep.mubr.f32.mxu0 %v342
        %734 = vmatmul.mubr.f32.gmra.mrb[0].mxu0 %v341
        %v735 = vpop.f32.mrb[0].mxu0
        %v736 = vadd.f32 0.0, %v735
        %v737 = vpop.f32.mrb[0].mxu0
        %v738 = vadd.f32 0.0, %v737
        %739 = vmatprep.mubr.f32.mxu0 %v346
        %740 = vmatmul.mubr.f32.gmra.mrb[0].mxu0 %v345
        %v741 = vpop.f32.mrb[0].mxu0
        %v742 = vadd.f32 0.0, %v741
        %v743 = vpop.f32.mrb[0].mxu0
        %v744 = vadd.f32 0.0, %v743
        %745 = vmatprep.mubr.f32.mxu0 %v350
        %746 = vmatmul.mubr.f32.gmra.mrb[0].mxu0 %v349
        %v747 = vpop.f32.mrb[0].mxu0
        %v748 = vadd.f32 0.0, %v747
        %v749 = vpop.f32.mrb[0].mxu0
        %v750 = vadd.f32 0.0, %v749
        %751 = vmatprep.mubr.f32.mxu0 %v354
        %752 = vmatmul.mubr.f32.gmra.mrb[0].mxu0 %v353
        %v753 = vpop.f32.mrb[0].mxu0
        %v754 = vadd.f32 0.0, %v753
        %v755 = vpop.f32.mrb[0].mxu0
        %v756 = vadd.f32 0.0, %v755
        %757 = vmatprep.mubr.f32.mxu0 %v358
        %758 = vmatmul.mubr.f32.gmra.mrb[0].mxu0 %v357
        %v759 = vpop.f32.mrb[0].mxu0
        %v760 = vadd.f32 0.0, %v759
        %v761 = vpop.f32.mrb[0].mxu0
        %v762 = vadd.f32 0.0, %v761
        %763 = vmatprep.mubr.f32.mxu0 %v362
        %764 = vmatmul.mubr.f32.gmra.mrb[0].mxu0 %v361
        %v765 = vpop.f32.mrb[0].mxu0
        %v766 = vadd.f32 0.0, %v765
        %v767 = vpop.f32.mrb[0].mxu0
        %v768 = vadd.f32 0.0, %v767
        %769 = vmatprep.mubr.f32.mxu0 %v366
        %770 = vmatmul.mubr.f32.gmra.mrb[0].mxu0 %v365
        %v771 = vpop.f32.mrb[0].mxu0
        %v772 = vadd.f32 0.0, %v771
        %v773 = vpop.f32.mrb[0].mxu0
        %v774 = vadd.f32 0.0, %v773
        %775 = vmatprep.mubr.f32.mxu0 %v370
        %776 = vmatmul.mubr.f32.gmra.mrb[0].mxu0 %v369
        %v777 = vpop.f32.mrb[0].mxu0
        %v778 = vadd.f32 0.0, %v777
        %v779 = vpop.f32.mrb[0].mxu0
        %v780 = vadd.f32 0.0, %v779
        %781 = vmatprep.mubr.f32.mxu0 %v374
        %782 = vmatmul.mubr.f32.gmra.mrb[0].mxu0 %v373
        %v783 = vpop.f32.mrb[0].mxu0
        %v784 = vadd.f32 0.0, %v783
        %v785 = vpop.f32.mrb[0].mxu0
        %v786 = vadd.f32 0.0, %v785
        %787 = vmatprep.mubr.f32.mxu0 %v378
        %788 = vmatmul.mubr.f32.gmra.mrb[0].mxu0 %v377
        %v789 = vpop.f32.mrb[0].mxu0
        %v790 = vadd.f32 0.0, %v789
        %v791 = vpop.f32.mrb[0].mxu0
        %v792 = vadd.f32 0.0, %v791
        %793 = vmatprep.mubr.f32.mxu0 %v382
        %794 = vmatmul.mubr.f32.gmra.mrb[0].mxu0 %v381
        %v795 = vpop.f32.mrb[0].mxu0
        %v796 = vadd.f32 0.0, %v795
        %v797 = vpop.f32.mrb[0].mxu0
        %v798 = vadd.f32 0.0, %v797
        %799 = vmatprep.mubr.f32.mxu0 %v386
        %800 = vmatmul.mubr.f32.gmra.mrb[0].mxu0 %v385
        %v801 = vpop.f32.mrb[0].mxu0
        %v802 = vadd.f32 0.0, %v801
        %v803 = vpop.f32.mrb[0].mxu0
        %v804 = vadd.f32 0.0, %v803
        %805 = vmatprep.mubr.f32.mxu0 %v390
        %806 = vmatmul.mubr.f32.gmra.mrb[0].mxu0 %v389
        %v807 = vpop.f32.mrb[0].mxu0
        %v808 = vadd.f32 0.0, %v807
        %v809 = vpop.f32.mrb[0].mxu0
        %v810 = vadd.f32 0.0, %v809
        %811 = vmatprep.mubr.f32.mxu0 %v394
        %812 = vmatmul.mubr.f32.gmra.mrb[0].mxu0 %v393
        %v813 = vpop.f32.mrb[0].mxu0
        %v814 = vadd.f32 0.0, %v813
        %v815 = vpop.f32.mrb[0].mxu0
        %v816 = vadd.f32 0.0, %v815
        %817 = vmatprep.mubr.f32.mxu0 %v398
        %818 = vmatmul.mubr.f32.gmra.mrb[0].mxu0 %v397
        %v819 = vpop.f32.mrb[0].mxu0
        %v820 = vadd.f32 0.0, %v819
        %v821 = vpop.f32.mrb[0].mxu0
        %v822 = vadd.f32 0.0, %v821
        %823 = vmatprep.mubr.f32.mxu0 %v402
        %824 = vmatmul.mubr.f32.gmra.mrb[0].mxu0 %v401
        %v825 = vpop.f32.mrb[0].mxu0
        %v826 = vadd.f32 0.0, %v825
        %v827 = vpop.f32.mrb[0].mxu0
        %v828 = vadd.f32 0.0, %v827
        %829 = vmatprep.mubr.f32.mxu0 %v406
        %830 = vmatmul.mubr.f32.gmra.mrb[0].mxu0 %v405
        %v831 = vpop.f32.mrb[0].mxu0
        %v832 = vadd.f32 0.0, %v831
        %v833 = vpop.f32.mrb[0].mxu0
        %v834 = vadd.f32 0.0, %v833
        %835 = vmatprep.mubr.f32.mxu0 %v410
        %836 = vmatmul.mubr.f32.gmra.mrb[0].mxu0 %v409
        %v837 = vpop.f32.mrb[0].mxu0
        %v838 = vadd.f32 0.0, %v837
        %v839 = vpop.f32.mrb[0].mxu0
        %v840 = vadd.f32 0.0, %v839
        %841 = vmatprep.mubr.f32.mxu0 %v414
        %842 = vmatmul.mubr.f32.gmra.mrb[0].mxu0 %v413
        %v843 = vpop.f32.mrb[0].mxu0
        %v844 = vadd.f32 0.0, %v843
        %v845 = vpop.f32.mrb[0].mxu0
        %v846 = vadd.f32 0.0, %v845
        %847 = vmatprep.mubr.f32.mxu0 %v418
        %848 = vmatmul.mubr.f32.gmra.mrb[0].mxu0 %v417
        %v849 = vpop.f32.mrb[0].mxu0
        %v850 = vadd.f32 0.0, %v849
        %v851 = vpop.f32.mrb[0].mxu0
        %v852 = vadd.f32 0.0, %v851
        %853 = vmatprep.mubr.f32.mxu0 %v422
        %854 = vmatmul.mubr.f32.gmra.mrb[0].mxu0 %v421
        %v855 = vpop.f32.mrb[0].mxu0
        %v856 = vadd.f32 0.0, %v855
        %v857 = vpop.f32.mrb[0].mxu0
        %v858 = vadd.f32 0.0, %v857
        %859 = vmatprep.mubr.f32.mxu0 %v426
        %860 = vmatmul.mubr.f32.gmra.mrb[0].mxu0 %v425
        %v861 = vpop.f32.mrb[0].mxu0
        %v862 = vadd.f32 0.0, %v861
        %v863 = vpop.f32.mrb[0].mxu0
        %v864 = vadd.f32 0.0, %v863
        %865 = vmatprep.mubr.f32.mxu0 %v430
        %866 = vmatmul.mubr.f32.gmra.mrb[0].mxu0 %v429
        %v867 = vpop.f32.mrb[0].mxu0
        %v868 = vadd.f32 0.0, %v867
        %v869 = vpop.f32.mrb[0].mxu0
        %v870 = vadd.f32 0.0, %v869
        %871 = vmatprep.mubr.f32.mxu0 %v434
        %872 = vmatmul.mubr.f32.gmra.mrb[0].mxu0 %v433
        %v873 = vpop.f32.mrb[0].mxu0
        %v874 = vadd.f32 0.0, %v873
        %v875 = vpop.f32.mrb[0].mxu0
        %v876 = vadd.f32 0.0, %v875
        %877 = vmatprep.mubr.f32.mxu0 %v438
        %878 = vmatmul.mubr.f32.gmra.mrb[0].mxu0 %v437
        %v879 = vpop.f32.mrb[0].mxu0
        %v880 = vadd.f32 0.0, %v879
        %v881 = vpop.f32.mrb[0].mxu0
        %v882 = vadd.f32 0.0, %v881
        %883 = vmatprep.mubr.f32.mxu0 %v442
        %884 = vmatmul.mubr.f32.gmra.mrb[0].mxu0 %v441
        %v885 = vpop.f32.mrb[0].mxu0
        %v886 = vadd.f32 0.0, %v885
        %v887 = vpop.f32.mrb[0].mxu0
        %v888 = vadd.f32 0.0, %v887
        %889 = vmatprep.mubr.f32.mxu0 %v446
        %890 = vmatmul.mubr.f32.gmra.mrb[0].mxu0 %v445
        %v891 = vpop.f32.mrb[0].mxu0
        %v892 = vadd.f32 0.0, %v891
        %v893 = vpop.f32.mrb[0].mxu0
        %v894 = vadd.f32 0.0, %v893
        %895 = vmatprep.mubr.f32.mxu0 %v450
        %896 = vmatmul.mubr.f32.gmra.mrb[0].mxu0 %v449
        %v897 = vpop.f32.mrb[0].mxu0
        %v898 = vadd.f32 0.0, %v897
        %v899 = vpop.f32.mrb[0].mxu0
        %v900 = vadd.f32 0.0, %v899
        %901 = vdwg.mxu0
        %902 = vmatprep.subr.mxu0 %v456
        %903 = vmatpush1.xpose.msra.mxu0 %v455
        %904 = vmatprep.subr.mxu0 %v460
        %905 = vmatpush1.xpose.msra.mxu0 %v459
        %906 = vmatprep.subr.mxu0 %v464
        %907 = vmatpush1.xpose.msra.mxu0 %v463
        %908 = vmatprep.subr.mxu0 %v468
        %909 = vmatpush1.xpose.msra.mxu0 %v467
        %910 = vmatprep.subr.mxu0 %v472
        %911 = vmatpush1.xpose.msra.mxu0 %v471
        %912 = vmatprep.subr.mxu0 %v476
        %913 = vmatpush1.xpose.msra.mxu0 %v475
        %914 = vmatprep.subr.mxu0 %v480
        %915 = vmatpush1.xpose.msra.mxu0 %v479
        %916 = vmatprep.subr.mxu0 %v484
        %917 = vmatpush1.xpose.msra.mxu0 %v483
        %918 = vmatprep.subr.mxu0 %v488
        %919 = vmatpush1.xpose.msra.mxu0 %v487
        %920 = vmatprep.subr.mxu0 %v492
        %921 = vmatpush1.xpose.msra.mxu0 %v491
        %922 = vmatprep.subr.mxu0 %v496
        %923 = vmatpush1.xpose.msra.mxu0 %v495
        %924 = vmatprep.subr.mxu0 %v500
        %925 = vmatpush1.xpose.msra.mxu0 %v499
        %926 = vmatprep.subr.mxu0 %v504
        %927 = vmatpush1.xpose.msra.mxu0 %v503
        %928 = vmatprep.subr.mxu0 %v508
        %929 = vmatpush1.xpose.msra.mxu0 %v507
        %930 = vmatprep.subr.mxu0 %v512
        %931 = vmatpush1.xpose.msra.mxu0 %v511
        %932 = vmatprep.subr.mxu0 %v516
        %933 = vmatpush1.xpose.msra.mxu0 %v515
        %934 = vmatprep.subr.mxu0 %v520
        %935 = vmatpush1.xpose.msra.mxu0 %v519
        %936 = vmatprep.subr.mxu0 %v524
        %937 = vmatpush1.xpose.msra.mxu0 %v523
        %938 = vmatprep.subr.mxu0 %v528
        %939 = vmatpush1.xpose.msra.mxu0 %v527
        %940 = vmatprep.subr.mxu0 %v532
        %941 = vmatpush1.xpose.msra.mxu0 %v531
        %942 = vmatprep.subr.mxu0 %v536
        %943 = vmatpush1.xpose.msra.mxu0 %v535
        %944 = vmatprep.subr.mxu0 %v540
        %945 = vmatpush1.xpose.msra.mxu0 %v539
        %946 = vmatprep.subr.mxu0 %v544
        %947 = vmatpush1.xpose.msra.mxu0 %v543
        %948 = vmatprep.subr.mxu0 %v548
        %949 = vmatpush1.xpose.msra.mxu0 %v547
        %950 = vmatprep.subr.mxu0 %v552
        %951 = vmatpush1.xpose.msra.mxu0 %v551
        %952 = vmatprep.subr.mxu0 %v556
        %953 = vmatpush1.xpose.msra.mxu0 %v555
        %954 = vmatprep.subr.mxu0 %v560
        %955 = vmatpush1.xpose.msra.mxu0 %v559
        %956 = vmatprep.subr.mxu0 %v564
        %957 = vmatpush1.xpose.msra.mxu0 %v563
        %958 = vmatprep.subr.mxu0 %v568
        %959 = vmatpush1.xpose.msra.mxu0 %v567
        %960 = vmatprep.subr.mxu0 %v572
        %961 = vmatpush1.xpose.msra.mxu0 %v571
        %962 = vmatprep.subr.mxu0 %v576
        %963 = vmatpush1.xpose.msra.mxu0 %v575
        %964 = vmatprep.subr.mxu0 %v580
        %965 = vmatpush1.xpose.msra.mxu0 %v579
        %966 = vmatprep.mubr.f32.mxu0 %v328
        %967 = vmatmul.mubr.f32.gmra.mrb[0].mxu0 %v327
        %v968 = vpop.f32.mrb[0].mxu0
        %v969 = vadd.f32 %v712, %v968
        %v970 = vpop.f32.mrb[0].mxu0
        %v971 = vadd.f32 %v714, %v970
        %972 = vmatprep.mubr.f32.mxu0 %v332
        %973 = vmatmul.mubr.f32.gmra.mrb[0].mxu0 %v331
        %v974 = vpop.f32.mrb[0].mxu0
        %v975 = vadd.f32 %v718, %v974
        %v976 = vpop.f32.mrb[0].mxu0
        %v977 = vadd.f32 %v720, %v976
        %978 = vmatprep.mubr.f32.mxu0 %v336
        %979 = vmatmul.mubr.f32.gmra.mrb[0].mxu0 %v335
        %v980 = vpop.f32.mrb[0].mxu0
        %v981 = vadd.f32 %v724, %v980
        %v982 = vpop.f32.mrb[0].mxu0
        %v983 = vadd.f32 %v726, %v982
        %984 = vmatprep.mubr.f32.mxu0 %v340
        %985 = vmatmul.mubr.f32.gmra.mrb[0].mxu0 %v339
        %v986 = vpop.f32.mrb[0].mxu0
        %v987 = vadd.f32 %v730, %v986
        %v988 = vpop.f32.mrb[0].mxu0
        %v989 = vadd.f32 %v732, %v988
        %990 = vmatprep.mubr.f32.mxu0 %v344
        %991 = vmatmul.mubr.f32.gmra.mrb[0].mxu0 %v343
        %v992 = vpop.f32.mrb[0].mxu0
        %v993 = vadd.f32 %v736, %v992
        %v994 = vpop.f32.mrb[0].mxu0
        %v995 = vadd.f32 %v738, %v994
        %996 = vmatprep.mubr.f32.mxu0 %v348
        %997 = vmatmul.mubr.f32.gmra.mrb[0].mxu0 %v347
        %v998 = vpop.f32.mrb[0].mxu0
        %v999 = vadd.f32 %v742, %v998
        %v1000 = vpop.f32.mrb[0].mxu0
        %v1001 = vadd.f32 %v744, %v1000
        %1002 = vmatprep.mubr.f32.mxu0 %v352
        %1003 = vmatmul.mubr.f32.gmra.mrb[0].mxu0 %v351
        %v1004 = vpop.f32.mrb[0].mxu0
        %v1005 = vadd.f32 %v748, %v1004
        %v1006 = vpop.f32.mrb[0].mxu0
        %v1007 = vadd.f32 %v750, %v1006
        %1008 = vmatprep.mubr.f32.mxu0 %v356
        %1009 = vmatmul.mubr.f32.gmra.mrb[0].mxu0 %v355
        %v1010 = vpop.f32.mrb[0].mxu0
        %v1011 = vadd.f32 %v754, %v1010
        %v1012 = vpop.f32.mrb[0].mxu0
        %v1013 = vadd.f32 %v756, %v1012
        %1014 = vmatprep.mubr.f32.mxu0 %v360
        %1015 = vmatmul.mubr.f32.gmra.mrb[0].mxu0 %v359
        %v1016 = vpop.f32.mrb[0].mxu0
        %v1017 = vadd.f32 %v760, %v1016
        %v1018 = vpop.f32.mrb[0].mxu0
        %v1019 = vadd.f32 %v762, %v1018
        %1020 = vmatprep.mubr.f32.mxu0 %v364
        %1021 = vmatmul.mubr.f32.gmra.mrb[0].mxu0 %v363
        %v1022 = vpop.f32.mrb[0].mxu0
        %v1023 = vadd.f32 %v766, %v1022
        %v1024 = vpop.f32.mrb[0].mxu0
        %v1025 = vadd.f32 %v768, %v1024
        %1026 = vmatprep.mubr.f32.mxu0 %v368
        %1027 = vmatmul.mubr.f32.gmra.mrb[0].mxu0 %v367
        %v1028 = vpop.f32.mrb[0].mxu0
        %v1029 = vadd.f32 %v772, %v1028
        %v1030 = vpop.f32.mrb[0].mxu0
        %v1031 = vadd.f32 %v774, %v1030
        %1032 = vmatprep.mubr.f32.mxu0 %v372
        %1033 = vmatmul.mubr.f32.gmra.mrb[0].mxu0 %v371
        %v1034 = vpop.f32.mrb[0].mxu0
        %v1035 = vadd.f32 %v778, %v1034
        %v1036 = vpop.f32.mrb[0].mxu0
        %v1037 = vadd.f32 %v780, %v1036
        %1038 = vmatprep.mubr.f32.mxu0 %v376
        %1039 = vmatmul.mubr.f32.gmra.mrb[0].mxu0 %v375
        %v1040 = vpop.f32.mrb[0].mxu0
        %v1041 = vadd.f32 %v784, %v1040
        %v1042 = vpop.f32.mrb[0].mxu0
        %v1043 = vadd.f32 %v786, %v1042
        %1044 = vmatprep.mubr.f32.mxu0 %v380
        %1045 = vmatmul.mubr.f32.gmra.mrb[0].mxu0 %v379
        %v1046 = vpop.f32.mrb[0].mxu0
        %v1047 = vadd.f32 %v790, %v1046
        %v1048 = vpop.f32.mrb[0].mxu0
        %v1049 = vadd.f32 %v792, %v1048
        %1050 = vmatprep.mubr.f32.mxu0 %v384
        %1051 = vmatmul.mubr.f32.gmra.mrb[0].mxu0 %v383
        %v1052 = vpop.f32.mrb[0].mxu0
        %v1053 = vadd.f32 %v796, %v1052
        %v1054 = vpop.f32.mrb[0].mxu0
        %v1055 = vadd.f32 %v798, %v1054
        %1056 = vmatprep.mubr.f32.mxu0 %v388
        %1057 = vmatmul.mubr.f32.gmra.mrb[0].mxu0 %v387
        %v1058 = vpop.f32.mrb[0].mxu0
        %v1059 = vadd.f32 %v802, %v1058
        %v1060 = vpop.f32.mrb[0].mxu0
        %v1061 = vadd.f32 %v804, %v1060
        %1062 = vmatprep.mubr.f32.mxu0 %v392
        %1063 = vmatmul.mubr.f32.gmra.mrb[0].mxu0 %v391
        %v1064 = vpop.f32.mrb[0].mxu0
        %v1065 = vadd.f32 %v808, %v1064
        %v1066 = vpop.f32.mrb[0].mxu0
        %v1067 = vadd.f32 %v810, %v1066
        %1068 = vmatprep.mubr.f32.mxu0 %v396
        %1069 = vmatmul.mubr.f32.gmra.mrb[0].mxu0 %v395
        %v1070 = vpop.f32.mrb[0].mxu0
        %v1071 = vadd.f32 %v814, %v1070
        %v1072 = vpop.f32.mrb[0].mxu0
        %v1073 = vadd.f32 %v816, %v1072
        %1074 = vmatprep.mubr.f32.mxu0 %v400
        %1075 = vmatmul.mubr.f32.gmra.mrb[0].mxu0 %v399
        %v1076 = vpop.f32.mrb[0].mxu0
        %v1077 = vadd.f32 %v820, %v1076
        %v1078 = vpop.f32.mrb[0].mxu0
        %v1079 = vadd.f32 %v822, %v1078
        %1080 = vmatprep.mubr.f32.mxu0 %v404
        %1081 = vmatmul.mubr.f32.gmra.mrb[0].mxu0 %v403
        %v1082 = vpop.f32.mrb[0].mxu0
        %v1083 = vadd.f32 %v826, %v1082
        %v1084 = vpop.f32.mrb[0].mxu0
        %v1085 = vadd.f32 %v828, %v1084
        %1086 = vmatprep.mubr.f32.mxu0 %v408
        %1087 = vmatmul.mubr.f32.gmra.mrb[0].mxu0 %v407
        %v1088 = vpop.f32.mrb[0].mxu0
        %v1089 = vadd.f32 %v832, %v1088
        %v1090 = vpop.f32.mrb[0].mxu0
        %v1091 = vadd.f32 %v834, %v1090
        %1092 = vmatprep.mubr.f32.mxu0 %v412
        %1093 = vmatmul.mubr.f32.gmra.mrb[0].mxu0 %v411
        %v1094 = vpop.f32.mrb[0].mxu0
        %v1095 = vadd.f32 %v838, %v1094
        %v1096 = vpop.f32.mrb[0].mxu0
        %v1097 = vadd.f32 %v840, %v1096
        %1098 = vmatprep.mubr.f32.mxu0 %v416
        %1099 = vmatmul.mubr.f32.gmra.mrb[0].mxu0 %v415
        %v1100 = vpop.f32.mrb[0].mxu0
        %v1101 = vadd.f32 %v844, %v1100
        %v1102 = vpop.f32.mrb[0].mxu0
        %v1103 = vadd.f32 %v846, %v1102
        %1104 = vmatprep.mubr.f32.mxu0 %v420
        %1105 = vmatmul.mubr.f32.gmra.mrb[0].mxu0 %v419
        %v1106 = vpop.f32.mrb[0].mxu0
        %v1107 = vadd.f32 %v850, %v1106
        %v1108 = vpop.f32.mrb[0].mxu0
        %v1109 = vadd.f32 %v852, %v1108
        %1110 = vmatprep.mubr.f32.mxu0 %v424
        %1111 = vmatmul.mubr.f32.gmra.mrb[0].mxu0 %v423
        %v1112 = vpop.f32.mrb[0].mxu0
        %v1113 = vadd.f32 %v856, %v1112
        %v1114 = vpop.f32.mrb[0].mxu0
        %v1115 = vadd.f32 %v858, %v1114
        %1116 = vmatprep.mubr.f32.mxu0 %v428
        %1117 = vmatmul.mubr.f32.gmra.mrb[0].mxu0 %v427
        %v1118 = vpop.f32.mrb[0].mxu0
        %v1119 = vadd.f32 %v862, %v1118
        %v1120 = vpop.f32.mrb[0].mxu0
        %v1121 = vadd.f32 %v864, %v1120
        %1122 = vmatprep.mubr.f32.mxu0 %v432
        %1123 = vmatmul.mubr.f32.gmra.mrb[0].mxu0 %v431
        %v1124 = vpop.f32.mrb[0].mxu0
        %v1125 = vadd.f32 %v868, %v1124
        %v1126 = vpop.f32.mrb[0].mxu0
        %v1127 = vadd.f32 %v870, %v1126
        %1128 = vmatprep.mubr.f32.mxu0 %v436
        %1129 = vmatmul.mubr.f32.gmra.mrb[0].mxu0 %v435
        %v1130 = vpop.f32.mrb[0].mxu0
        %v1131 = vadd.f32 %v874, %v1130
        %v1132 = vpop.f32.mrb[0].mxu0
        %v1133 = vadd.f32 %v876, %v1132
        %1134 = vmatprep.mubr.f32.mxu0 %v440
        %1135 = vmatmul.mubr.f32.gmra.mrb[0].mxu0 %v439
        %v1136 = vpop.f32.mrb[0].mxu0
        %v1137 = vadd.f32 %v880, %v1136
        %v1138 = vpop.f32.mrb[0].mxu0
        %v1139 = vadd.f32 %v882, %v1138
        %1140 = vmatprep.mubr.f32.mxu0 %v444
        %1141 = vmatmul.mubr.f32.gmra.mrb[0].mxu0 %v443
        %v1142 = vpop.f32.mrb[0].mxu0
        %v1143 = vadd.f32 %v886, %v1142
        %v1144 = vpop.f32.mrb[0].mxu0
        %v1145 = vadd.f32 %v888, %v1144
        %1146 = vmatprep.mubr.f32.mxu0 %v448
        %1147 = vmatmul.mubr.f32.gmra.mrb[0].mxu0 %v447
        %v1148 = vpop.f32.mrb[0].mxu0
        %v1149 = vadd.f32 %v892, %v1148
        %v1150 = vpop.f32.mrb[0].mxu0
        %v1151 = vadd.f32 %v894, %v1150
        %1152 = vmatprep.mubr.f32.mxu0 %v452
        %1153 = vmatmul.mubr.f32.gmra.mrb[0].mxu0 %v451
        %v1154 = vpop.f32.mrb[0].mxu0
        %v1155 = vadd.f32 %v898, %v1154
        %v1156 = vpop.f32.mrb[0].mxu0
        %v1157 = vadd.f32 %v900, %v1156
        %1158 = vdwg.mxu0
        %v1159 = vadd.f32 %v581, %v969
        %v1160 = vadd.f32 %v582, %v971
        %v1161 = vadd.f32 %v583, %v975
        %v1162 = vadd.f32 %v584, %v977
        %v1163 = vadd.f32 %v585, %v981
        %v1164 = vadd.f32 %v586, %v983
        %v1165 = vadd.f32 %v587, %v987
        %v1166 = vadd.f32 %v588, %v989
        %v1167 = vadd.f32 %v589, %v993
        %v1168 = vadd.f32 %v590, %v995
        %v1169 = vadd.f32 %v591, %v999
        %v1170 = vadd.f32 %v592, %v1001
        %v1171 = vadd.f32 %v593, %v1005
        %v1172 = vadd.f32 %v594, %v1007
        %v1173 = vadd.f32 %v595, %v1011
        %v1174 = vadd.f32 %v596, %v1013
        %v1175 = vadd.f32 %v597, %v1017
        %v1176 = vadd.f32 %v598, %v1019
        %v1177 = vadd.f32 %v599, %v1023
        %v1178 = vadd.f32 %v600, %v1025
        %v1179 = vadd.f32 %v601, %v1029
        %v1180 = vadd.f32 %v602, %v1031
        %v1181 = vadd.f32 %v603, %v1035
        %v1182 = vadd.f32 %v604, %v1037
        %v1183 = vadd.f32 %v605, %v1041
        %v1184 = vadd.f32 %v606, %v1043
        %v1185 = vadd.f32 %v607, %v1047
        %v1186 = vadd.f32 %v608, %v1049
        %v1187 = vadd.f32 %v609, %v1053
        %v1188 = vadd.f32 %v610, %v1055
        %v1189 = vadd.f32 %v611, %v1059
        %v1190 = vadd.f32 %v612, %v1061
        %v1191 = vadd.f32 %v613, %v1065
        %v1192 = vadd.f32 %v614, %v1067
        %v1193 = vadd.f32 %v615, %v1071
        %v1194 = vadd.f32 %v616, %v1073
        %v1195 = vadd.f32 %v617, %v1077
        %v1196 = vadd.f32 %v618, %v1079
        %v1197 = vadd.f32 %v619, %v1083
        %v1198 = vadd.f32 %v620, %v1085
        %v1199 = vadd.f32 %v621, %v1089
        %v1200 = vadd.f32 %v622, %v1091
        %v1201 = vadd.f32 %v623, %v1095
        %v1202 = vadd.f32 %v624, %v1097
        %v1203 = vadd.f32 %v625, %v1101
        %v1204 = vadd.f32 %v626, %v1103
        %v1205 = vadd.f32 %v627, %v1107
        %v1206 = vadd.f32 %v628, %v1109
        %v1207 = vadd.f32 %v629, %v1113
        %v1208 = vadd.f32 %v630, %v1115
        %v1209 = vadd.f32 %v631, %v1119
        %v1210 = vadd.f32 %v632, %v1121
        %v1211 = vadd.f32 %v633, %v1125
        %v1212 = vadd.f32 %v634, %v1127
        %v1213 = vadd.f32 %v635, %v1131
        %v1214 = vadd.f32 %v636, %v1133
        %v1215 = vadd.f32 %v637, %v1137
        %v1216 = vadd.f32 %v638, %v1139
        %v1217 = vadd.f32 %v639, %v1143
        %v1218 = vadd.f32 %v640, %v1145
        %v1219 = vadd.f32 %v641, %v1149
        %v1220 = vadd.f32 %v642, %v1151
        %v1221 = vadd.f32 %v643, %v1155
        %v1222 = vadd.f32 %v644, %v1157
        %1223 = vst [vmem:[%s215] sm:$0xff] %v1159
        %1224 = vst [vmem:[%s215 + $0x8] sm:$0xff] %v1160
        %1225 = vst [vmem:[%s215 + $0x10] sm:$0xff] %v1161
        %1226 = vst [vmem:[%s215 + $0x18] sm:$0xff] %v1162
        %1227 = vst [vmem:[%s215 + $0x20] sm:$0xff] %v1163
        %1228 = vst [vmem:[%s215 + $0x28] sm:$0xff] %v1164
        %1229 = vst [vmem:[%s215 + $0x30] sm:$0xff] %v1165
        %1230 = vst [vmem:[%s215 + $0x38] sm:$0xff] %v1166
        %1231 = vst [vmem:[%s215 + $0x40] sm:$0xff] %v1167
        %1232 = vst [vmem:[%s215 + $0x48] sm:$0xff] %v1168
        %1233 = vst [vmem:[%s215 + $0x50] sm:$0xff] %v1169
        %1234 = vst [vmem:[%s215 + $0x58] sm:$0xff] %v1170
        %1235 = vst [vmem:[%s215 + $0x60] sm:$0xff] %v1171
        %1236 = vst [vmem:[%s215 + $0x68] sm:$0xff] %v1172
        %1237 = vst [vmem:[%s215 + $0x70] sm:$0xff] %v1173
        %1238 = vst [vmem:[%s215 + $0x78] sm:$0xff] %v1174
        %1239 = vst [vmem:[%s215 + $0x80] sm:$0xff] %v1175
        %1240 = vst [vmem:[%s215 + $0x88] sm:$0xff] %v1176
        %1241 = vst [vmem:[%s215 + $0x90] sm:$0xff] %v1177
        %1242 = vst [vmem:[%s215 + $0x98] sm:$0xff] %v1178
        %1243 = vst [vmem:[%s215 + $0xa0] sm:$0xff] %v1179
        %1244 = vst [vmem:[%s215 + $0xa8] sm:$0xff] %v1180
        %1245 = vst [vmem:[%s215 + $0xb0] sm:$0xff] %v1181
        %1246 = vst [vmem:[%s215 + $0xb8] sm:$0xff] %v1182
        %1247 = vst [vmem:[%s215 + $0xc0] sm:$0xff] %v1183
        %1248 = vst [vmem:[%s215 + $0xc8] sm:$0xff] %v1184
        %1249 = vst [vmem:[%s215 + $0xd0] sm:$0xff] %v1185
        %1250 = vst [vmem:[%s215 + $0xd8] sm:$0xff] %v1186
        %1251 = vst [vmem:[%s215 + $0xe0] sm:$0xff] %v1187
        %1252 = vst [vmem:[%s215 + $0xe8] sm:$0xff] %v1188
        %1253 = vst [vmem:[%s215 + $0xf0] sm:$0xff] %v1189
        %1254 = vst [vmem:[%s215 + $0xf8] sm:$0xff] %v1190
        %1255 = vst [vmem:[%s215 + $0x100] sm:$0xff] %v1191
        %1256 = vst [vmem:[%s215 + $0x108] sm:$0xff] %v1192
        %1257 = vst [vmem:[%s215 + $0x110] sm:$0xff] %v1193
        %1258 = vst [vmem:[%s215 + $0x118] sm:$0xff] %v1194
        %1259 = vst [vmem:[%s215 + $0x120] sm:$0xff] %v1195
        %1260 = vst [vmem:[%s215 + $0x128] sm:$0xff] %v1196
        %1261 = vst [vmem:[%s215 + $0x130] sm:$0xff] %v1197
        %1262 = vst [vmem:[%s215 + $0x138] sm:$0xff] %v1198
        %1263 = vst [vmem:[%s215 + $0x140] sm:$0xff] %v1199
        %1264 = vst [vmem:[%s215 + $0x148] sm:$0xff] %v1200
        %1265 = vst [vmem:[%s215 + $0x150] sm:$0xff] %v1201
        %1266 = vst [vmem:[%s215 + $0x158] sm:$0xff] %v1202
        %1267 = vst [vmem:[%s215 + $0x160] sm:$0xff] %v1203
        %1268 = vst [vmem:[%s215 + $0x168] sm:$0xff] %v1204
        %1269 = vst [vmem:[%s215 + $0x170] sm:$0xff] %v1205
        %1270 = vst [vmem:[%s215 + $0x178] sm:$0xff] %v1206
        %1271 = vst [vmem:[%s215 + $0x180] sm:$0xff] %v1207
        %1272 = vst [vmem:[%s215 + $0x188] sm:$0xff] %v1208
        %1273 = vst [vmem:[%s215 + $0x190] sm:$0xff] %v1209
        %1274 = vst [vmem:[%s215 + $0x198] sm:$0xff] %v1210
        %1275 = vst [vmem:[%s215 + $0x1a0] sm:$0xff] %v1211
        %1276 = vst [vmem:[%s215 + $0x1a8] sm:$0xff] %v1212
        %1277 = vst [vmem:[%s215 + $0x1b0] sm:$0xff] %v1213
        %1278 = vst [vmem:[%s215 + $0x1b8] sm:$0xff] %v1214
        %1279 = vst [vmem:[%s215 + $0x1c0] sm:$0xff] %v1215
        %1280 = vst [vmem:[%s215 + $0x1c8] sm:$0xff] %v1216
        %1281 = vst [vmem:[%s215 + $0x1d0] sm:$0xff] %v1217
        %1282 = vst [vmem:[%s215 + $0x1d8] sm:$0xff] %v1218
        %1283 = vst [vmem:[%s215 + $0x1e0] sm:$0xff] %v1219
        %1284 = vst [vmem:[%s215 + $0x1e8] sm:$0xff] %v1220
        %1285 = vst [vmem:[%s215 + $0x1f0] sm:$0xff] %v1221
        %1286 = vst [vmem:[%s215 + $0x1f8] sm:$0xff] %v1222
        %v1287 = vld [vmem:[#allocation2] sm:$0xff]
        %v1288 = vld [vmem:[#allocation2 + $0x8] sm:$0xff]
        %v1289 = vld [vmem:[#allocation2 + $0x10] sm:$0xff]
        %v1290 = vld [vmem:[#allocation2 + $0x18] sm:$0xff]
        %v1291 = vld [vmem:[#allocation2 + $0x20] sm:$0xff]
        %v1292 = vld [vmem:[#allocation2 + $0x28] sm:$0xff]
        %v1293 = vld [vmem:[#allocation2 + $0x30] sm:$0xff]
        %v1294 = vld [vmem:[#allocation2 + $0x38] sm:$0xff]
        %v1295 = vld [vmem:[#allocation2 + $0x40] sm:$0xff]
        %v1296 = vld [vmem:[#allocation2 + $0x48] sm:$0xff]
        %v1297 = vld [vmem:[#allocation2 + $0x50] sm:$0xff]
        %v1298 = vld [vmem:[#allocation2 + $0x58] sm:$0xff]
        %v1299 = vld [vmem:[#allocation2 + $0x60] sm:$0xff]
        %v1300 = vld [vmem:[#allocation2 + $0x68] sm:$0xff]
        %v1301 = vld [vmem:[#allocation2 + $0x70] sm:$0xff]
        %v1302 = vld [vmem:[#allocation2 + $0x78] sm:$0xff]
        %v1303 = vld [vmem:[#allocation2 + $0x80] sm:$0xff]
        %v1304 = vld [vmem:[#allocation2 + $0x88] sm:$0xff]
        %v1305 = vld [vmem:[#allocation2 + $0x90] sm:$0xff]
        %v1306 = vld [vmem:[#allocation2 + $0x98] sm:$0xff]
        %v1307 = vld [vmem:[#allocation2 + $0xa0] sm:$0xff]
        %v1308 = vld [vmem:[#allocation2 + $0xa8] sm:$0xff]
        %v1309 = vld [vmem:[#allocation2 + $0xb0] sm:$0xff]
        %v1310 = vld [vmem:[#allocation2 + $0xb8] sm:$0xff]
        %v1311 = vld [vmem:[#allocation2 + $0xc0] sm:$0xff]
        %v1312 = vld [vmem:[#allocation2 + $0xc8] sm:$0xff]
        %v1313 = vld [vmem:[#allocation2 + $0xd0] sm:$0xff]
        %v1314 = vld [vmem:[#allocation2 + $0xd8] sm:$0xff]
        %v1315 = vld [vmem:[#allocation2 + $0xe0] sm:$0xff]
        %v1316 = vld [vmem:[#allocation2 + $0xe8] sm:$0xff]
        %v1317 = vld [vmem:[#allocation2 + $0xf0] sm:$0xff]
        %v1318 = vld [vmem:[#allocation2 + $0xf8] sm:$0xff]
        %v1319 = vmul.f32 %v325, %v325
        %v1320 = vmul.f32 %v326, %v326
        %v1321 = vmul.f32 %v327, %v327
        %v1322 = vmul.f32 %v328, %v328
        %v1323 = vmul.f32 %v329, %v329
        %v1324 = vmul.f32 %v330, %v330
        %v1325 = vmul.f32 %v331, %v331
        %v1326 = vmul.f32 %v332, %v332
        %v1327 = vmul.f32 %v333, %v333
        %v1328 = vmul.f32 %v334, %v334
        %v1329 = vmul.f32 %v335, %v335
        %v1330 = vmul.f32 %v336, %v336
        %v1331 = vmul.f32 %v337, %v337
        %v1332 = vmul.f32 %v338, %v338
        %v1333 = vmul.f32 %v339, %v339
        %v1334 = vmul.f32 %v340, %v340
        %v1335 = vmul.f32 %v341, %v341
        %v1336 = vmul.f32 %v342, %v342
        %v1337 = vmul.f32 %v343, %v343
        %v1338 = vmul.f32 %v344, %v344
        %v1339 = vmul.f32 %v345, %v345
        %v1340 = vmul.f32 %v346, %v346
        %v1341 = vmul.f32 %v347, %v347
        %v1342 = vmul.f32 %v348, %v348
        %v1343 = vmul.f32 %v349, %v349
        %v1344 = vmul.f32 %v350, %v350
        %v1345 = vmul.f32 %v351, %v351
        %v1346 = vmul.f32 %v352, %v352
        %v1347 = vmul.f32 %v353, %v353
        %v1348 = vmul.f32 %v354, %v354
        %v1349 = vmul.f32 %v355, %v355
        %v1350 = vmul.f32 %v356, %v356
        %v1351 = vmul.f32 %v357, %v357
        %v1352 = vmul.f32 %v358, %v358
        %v1353 = vmul.f32 %v359, %v359
        %v1354 = vmul.f32 %v360, %v360
        %v1355 = vmul.f32 %v361, %v361
        %v1356 = vmul.f32 %v362, %v362
        %v1357 = vmul.f32 %v363, %v363
        %v1358 = vmul.f32 %v364, %v364
        %v1359 = vmul.f32 %v365, %v365
        %v1360 = vmul.f32 %v366, %v366
        %v1361 = vmul.f32 %v367, %v367
        %v1362 = vmul.f32 %v368, %v368
        %v1363 = vmul.f32 %v369, %v369
        %v1364 = vmul.f32 %v370, %v370
        %v1365 = vmul.f32 %v371, %v371
        %v1366 = vmul.f32 %v372, %v372
        %v1367 = vmul.f32 %v373, %v373
        %v1368 = vmul.f32 %v374, %v374
        %v1369 = vmul.f32 %v375, %v375
        %v1370 = vmul.f32 %v376, %v376
        %v1371 = vmul.f32 %v377, %v377
        %v1372 = vmul.f32 %v378, %v378
        %v1373 = vmul.f32 %v379, %v379
        %v1374 = vmul.f32 %v380, %v380
        %v1375 = vmul.f32 %v381, %v381
        %v1376 = vmul.f32 %v382, %v382
        %v1377 = vmul.f32 %v383, %v383
        %v1378 = vmul.f32 %v384, %v384
        %v1379 = vmul.f32 %v385, %v385
        %v1380 = vmul.f32 %v386, %v386
        %v1381 = vmul.f32 %v387, %v387
        %v1382 = vmul.f32 %v388, %v388
        %v1383 = vmul.f32 %v389, %v389
        %v1384 = vmul.f32 %v390, %v390
        %v1385 = vmul.f32 %v391, %v391
        %v1386 = vmul.f32 %v392, %v392
        %v1387 = vmul.f32 %v393, %v393
        %v1388 = vmul.f32 %v394, %v394
        %v1389 = vmul.f32 %v395, %v395
        %v1390 = vmul.f32 %v396, %v396
        %v1391 = vmul.f32 %v397, %v397
        %v1392 = vmul.f32 %v398, %v398
        %v1393 = vmul.f32 %v399, %v399
        %v1394 = vmul.f32 %v400, %v400
        %v1395 = vmul.f32 %v401, %v401
        %v1396 = vmul.f32 %v402, %v402
        %v1397 = vmul.f32 %v403, %v403
        %v1398 = vmul.f32 %v404, %v404
        %v1399 = vmul.f32 %v405, %v405
        %v1400 = vmul.f32 %v406, %v406
        %v1401 = vmul.f32 %v407, %v407
        %v1402 = vmul.f32 %v408, %v408
        %v1403 = vmul.f32 %v409, %v409
        %v1404 = vmul.f32 %v410, %v410
        %v1405 = vmul.f32 %v411, %v411
        %v1406 = vmul.f32 %v412, %v412
        %v1407 = vmul.f32 %v413, %v413
        %v1408 = vmul.f32 %v414, %v414
        %v1409 = vmul.f32 %v415, %v415
        %v1410 = vmul.f32 %v416, %v416
        %v1411 = vmul.f32 %v417, %v417
        %v1412 = vmul.f32 %v418, %v418
        %v1413 = vmul.f32 %v419, %v419
        %v1414 = vmul.f32 %v420, %v420
        %v1415 = vmul.f32 %v421, %v421
        %v1416 = vmul.f32 %v422, %v422
        %v1417 = vmul.f32 %v423, %v423
        %v1418 = vmul.f32 %v424, %v424
        %v1419 = vmul.f32 %v425, %v425
        %v1420 = vmul.f32 %v426, %v426
        %v1421 = vmul.f32 %v427, %v427
        %v1422 = vmul.f32 %v428, %v428
        %v1423 = vmul.f32 %v429, %v429
        %v1424 = vmul.f32 %v430, %v430
        %v1425 = vmul.f32 %v431, %v431
        %v1426 = vmul.f32 %v432, %v432
        %v1427 = vmul.f32 %v433, %v433
        %v1428 = vmul.f32 %v434, %v434
        %v1429 = vmul.f32 %v435, %v435
        %v1430 = vmul.f32 %v436, %v436
        %v1431 = vmul.f32 %v437, %v437
        %v1432 = vmul.f32 %v438, %v438
        %v1433 = vmul.f32 %v439, %v439
        %v1434 = vmul.f32 %v440, %v440
        %v1435 = vmul.f32 %v441, %v441
        %v1436 = vmul.f32 %v442, %v442
        %v1437 = vmul.f32 %v443, %v443
        %v1438 = vmul.f32 %v444, %v444
        %v1439 = vmul.f32 %v445, %v445
        %v1440 = vmul.f32 %v446, %v446
        %v1441 = vmul.f32 %v447, %v447
        %v1442 = vmul.f32 %v448, %v448
        %v1443 = vmul.f32 %v449, %v449
        %v1444 = vmul.f32 %v450, %v450
        %v1445 = vmul.f32 %v451, %v451
        %v1446 = vmul.f32 %v452, %v452
        %v1447 = vadd.f32 %v1319, %v1320
        %v1448 = vadd.f32 %v1447, %v1321
        %v1449 = vadd.f32 %v1448, %v1322
        %1450 = vadd.xlane.f32.xlu0 %v1449
        %v1451 = vpop.xlane.xlu0 %1450
        %v1452 = vadd.f32 %v1323, %v1324
        %v1453 = vadd.f32 %v1452, %v1325
        %v1454 = vadd.f32 %v1453, %v1326
        %1455 = vadd.xlane.f32.xlu0 %v1454
        %v1456 = vpop.xlane.xlu0 %1455
        %v1457 = vadd.f32 %v1327, %v1328
        %v1458 = vadd.f32 %v1457, %v1329
        %v1459 = vadd.f32 %v1458, %v1330
        %1460 = vadd.xlane.f32.xlu0 %v1459
        %v1461 = vpop.xlane.xlu0 %1460
        %v1462 = vadd.f32 %v1331, %v1332
        %v1463 = vadd.f32 %v1462, %v1333
        %v1464 = vadd.f32 %v1463, %v1334
        %1465 = vadd.xlane.f32.xlu0 %v1464
        %v1466 = vpop.xlane.xlu0 %1465
        %v1467 = vadd.f32 %v1335, %v1336
        %v1468 = vadd.f32 %v1467, %v1337
        %v1469 = vadd.f32 %v1468, %v1338
        %1470 = vadd.xlane.f32.xlu0 %v1469
        %v1471 = vpop.xlane.xlu0 %1470
        %v1472 = vadd.f32 %v1339, %v1340
        %v1473 = vadd.f32 %v1472, %v1341
        %v1474 = vadd.f32 %v1473, %v1342
        %1475 = vadd.xlane.f32.xlu0 %v1474
        %v1476 = vpop.xlane.xlu0 %1475
        %v1477 = vadd.f32 %v1343, %v1344
        %v1478 = vadd.f32 %v1477, %v1345
        %v1479 = vadd.f32 %v1478, %v1346
        %1480 = vadd.xlane.f32.xlu0 %v1479
        %v1481 = vpop.xlane.xlu0 %1480
        %v1482 = vadd.f32 %v1347, %v1348
        %v1483 = vadd.f32 %v1482, %v1349
        %v1484 = vadd.f32 %v1483, %v1350
        %1485 = vadd.xlane.f32.xlu0 %v1484
        %v1486 = vpop.xlane.xlu0 %1485
        %v1487 = vadd.f32 %v1351, %v1352
        %v1488 = vadd.f32 %v1487, %v1353
        %v1489 = vadd.f32 %v1488, %v1354
        %1490 = vadd.xlane.f32.xlu0 %v1489
        %v1491 = vpop.xlane.xlu0 %1490
        %v1492 = vadd.f32 %v1355, %v1356
        %v1493 = vadd.f32 %v1492, %v1357
        %v1494 = vadd.f32 %v1493, %v1358
        %1495 = vadd.xlane.f32.xlu0 %v1494
        %v1496 = vpop.xlane.xlu0 %1495
        %v1497 = vadd.f32 %v1359, %v1360
        %v1498 = vadd.f32 %v1497, %v1361
        %v1499 = vadd.f32 %v1498, %v1362
        %1500 = vadd.xlane.f32.xlu0 %v1499
        %v1501 = vpop.xlane.xlu0 %1500
        %v1502 = vadd.f32 %v1363, %v1364
        %v1503 = vadd.f32 %v1502, %v1365
        %v1504 = vadd.f32 %v1503, %v1366
        %1505 = vadd.xlane.f32.xlu0 %v1504
        %v1506 = vpop.xlane.xlu0 %1505
        %v1507 = vadd.f32 %v1367, %v1368
        %v1508 = vadd.f32 %v1507, %v1369
        %v1509 = vadd.f32 %v1508, %v1370
        %1510 = vadd.xlane.f32.xlu0 %v1509
        %v1511 = vpop.xlane.xlu0 %1510
        %v1512 = vadd.f32 %v1371, %v1372
        %v1513 = vadd.f32 %v1512, %v1373
        %v1514 = vadd.f32 %v1513, %v1374
        %1515 = vadd.xlane.f32.xlu0 %v1514
        %v1516 = vpop.xlane.xlu0 %1515
        %v1517 = vadd.f32 %v1375, %v1376
        %v1518 = vadd.f32 %v1517, %v1377
        %v1519 = vadd.f32 %v1518, %v1378
        %1520 = vadd.xlane.f32.xlu0 %v1519
        %v1521 = vpop.xlane.xlu0 %1520
        %v1522 = vadd.f32 %v1379, %v1380
        %v1523 = vadd.f32 %v1522, %v1381
        %v1524 = vadd.f32 %v1523, %v1382
        %1525 = vadd.xlane.f32.xlu0 %v1524
        %v1526 = vpop.xlane.xlu0 %1525
        %v1527 = vadd.f32 %v1383, %v1384
        %v1528 = vadd.f32 %v1527, %v1385
        %v1529 = vadd.f32 %v1528, %v1386
        %1530 = vadd.xlane.f32.xlu0 %v1529
        %v1531 = vpop.xlane.xlu0 %1530
        %v1532 = vadd.f32 %v1387, %v1388
        %v1533 = vadd.f32 %v1532, %v1389
        %v1534 = vadd.f32 %v1533, %v1390
        %1535 = vadd.xlane.f32.xlu0 %v1534
        %v1536 = vpop.xlane.xlu0 %1535
        %v1537 = vadd.f32 %v1391, %v1392
        %v1538 = vadd.f32 %v1537, %v1393
        %v1539 = vadd.f32 %v1538, %v1394
        %1540 = vadd.xlane.f32.xlu0 %v1539
        %v1541 = vpop.xlane.xlu0 %1540
        %v1542 = vadd.f32 %v1395, %v1396
        %v1543 = vadd.f32 %v1542, %v1397
        %v1544 = vadd.f32 %v1543, %v1398
        %1545 = vadd.xlane.f32.xlu0 %v1544
        %v1546 = vpop.xlane.xlu0 %1545
        %v1547 = vadd.f32 %v1399, %v1400
        %v1548 = vadd.f32 %v1547, %v1401
        %v1549 = vadd.f32 %v1548, %v1402
        %1550 = vadd.xlane.f32.xlu0 %v1549
        %v1551 = vpop.xlane.xlu0 %1550
        %v1552 = vadd.f32 %v1403, %v1404
        %v1553 = vadd.f32 %v1552, %v1405
        %v1554 = vadd.f32 %v1553, %v1406
        %1555 = vadd.xlane.f32.xlu0 %v1554
        %v1556 = vpop.xlane.xlu0 %1555
        %v1557 = vadd.f32 %v1407, %v1408
        %v1558 = vadd.f32 %v1557, %v1409
        %v1559 = vadd.f32 %v1558, %v1410
        %1560 = vadd.xlane.f32.xlu0 %v1559
        %v1561 = vpop.xlane.xlu0 %1560
        %v1562 = vadd.f32 %v1411, %v1412
        %v1563 = vadd.f32 %v1562, %v1413
        %v1564 = vadd.f32 %v1563, %v1414
        %1565 = vadd.xlane.f32.xlu0 %v1564
        %v1566 = vpop.xlane.xlu0 %1565
        %v1567 = vadd.f32 %v1415, %v1416
        %v1568 = vadd.f32 %v1567, %v1417
        %v1569 = vadd.f32 %v1568, %v1418
        %1570 = vadd.xlane.f32.xlu0 %v1569
        %v1571 = vpop.xlane.xlu0 %1570
        %v1572 = vadd.f32 %v1419, %v1420
        %v1573 = vadd.f32 %v1572, %v1421
        %v1574 = vadd.f32 %v1573, %v1422
        %1575 = vadd.xlane.f32.xlu0 %v1574
        %v1576 = vpop.xlane.xlu0 %1575
        %v1577 = vadd.f32 %v1423, %v1424
        %v1578 = vadd.f32 %v1577, %v1425
        %v1579 = vadd.f32 %v1578, %v1426
        %1580 = vadd.xlane.f32.xlu0 %v1579
        %v1581 = vpop.xlane.xlu0 %1580
        %v1582 = vadd.f32 %v1427, %v1428
        %v1583 = vadd.f32 %v1582, %v1429
        %v1584 = vadd.f32 %v1583, %v1430
        %1585 = vadd.xlane.f32.xlu0 %v1584
        %v1586 = vpop.xlane.xlu0 %1585
        %v1587 = vadd.f32 %v1431, %v1432
        %v1588 = vadd.f32 %v1587, %v1433
        %v1589 = vadd.f32 %v1588, %v1434
        %1590 = vadd.xlane.f32.xlu0 %v1589
        %v1591 = vpop.xlane.xlu0 %1590
        %v1592 = vadd.f32 %v1435, %v1436
        %v1593 = vadd.f32 %v1592, %v1437
        %v1594 = vadd.f32 %v1593, %v1438
        %1595 = vadd.xlane.f32.xlu0 %v1594
        %v1596 = vpop.xlane.xlu0 %1595
        %v1597 = vadd.f32 %v1439, %v1440
        %v1598 = vadd.f32 %v1597, %v1441
        %v1599 = vadd.f32 %v1598, %v1442
        %1600 = vadd.xlane.f32.xlu0 %v1599
        %v1601 = vpop.xlane.xlu0 %1600
        %v1602 = vadd.f32 %v1443, %v1444
        %v1603 = vadd.f32 %v1602, %v1445
        %v1604 = vadd.f32 %v1603, %v1446
        %1605 = vadd.xlane.f32.xlu0 %v1604
        %v1606 = vpop.xlane.xlu0 %1605
        %v1607 = vadd.f32 %v1287, %v1451
        %v1608 = vadd.f32 %v1288, %v1456
        %v1609 = vadd.f32 %v1289, %v1461
        %v1610 = vadd.f32 %v1290, %v1466
        %v1611 = vadd.f32 %v1291, %v1471
        %v1612 = vadd.f32 %v1292, %v1476
        %v1613 = vadd.f32 %v1293, %v1481
        %v1614 = vadd.f32 %v1294, %v1486
        %v1615 = vadd.f32 %v1295, %v1491
        %v1616 = vadd.f32 %v1296, %v1496
        %v1617 = vadd.f32 %v1297, %v1501
        %v1618 = vadd.f32 %v1298, %v1506
        %v1619 = vadd.f32 %v1299, %v1511
        %v1620 = vadd.f32 %v1300, %v1516
        %v1621 = vadd.f32 %v1301, %v1521
        %v1622 = vadd.f32 %v1302, %v1526
        %v1623 = vadd.f32 %v1303, %v1531
        %v1624 = vadd.f32 %v1304, %v1536
        %v1625 = vadd.f32 %v1305, %v1541
        %v1626 = vadd.f32 %v1306, %v1546
        %v1627 = vadd.f32 %v1307, %v1551
        %v1628 = vadd.f32 %v1308, %v1556
        %v1629 = vadd.f32 %v1309, %v1561
        %v1630 = vadd.f32 %v1310, %v1566
        %v1631 = vadd.f32 %v1311, %v1571
        %v1632 = vadd.f32 %v1312, %v1576
        %v1633 = vadd.f32 %v1313, %v1581
        %v1634 = vadd.f32 %v1314, %v1586
        %v1635 = vadd.f32 %v1315, %v1591
        %v1636 = vadd.f32 %v1316, %v1596
        %v1637 = vadd.f32 %v1317, %v1601
        %v1638 = vadd.f32 %v1318, %v1606
        %vm1639 = vcmask 7168
        %1640 = vst.msk [vmem:[#allocation2] sm:$0xff] %vm1639, %v1607
        %1641 = vst.msk [vmem:[#allocation2 + $0x8] sm:$0xff] %vm1639, %v1608
        %1642 = vst.msk [vmem:[#allocation2 + $0x10] sm:$0xff] %vm1639, %v1609
        %1643 = vst.msk [vmem:[#allocation2 + $0x18] sm:$0xff] %vm1639, %v1610
        %1644 = vst.msk [vmem:[#allocation2 + $0x20] sm:$0xff] %vm1639, %v1611
        %1645 = vst.msk [vmem:[#allocation2 + $0x28] sm:$0xff] %vm1639, %v1612
        %1646 = vst.msk [vmem:[#allocation2 + $0x30] sm:$0xff] %vm1639, %v1613
        %1647 = vst.msk [vmem:[#allocation2 + $0x38] sm:$0xff] %vm1639, %v1614
        %1648 = vst.msk [vmem:[#allocation2 + $0x40] sm:$0xff] %vm1639, %v1615
        %1649 = vst.msk [vmem:[#allocation2 + $0x48] sm:$0xff] %vm1639, %v1616
        %1650 = vst.msk [vmem:[#allocation2 + $0x50] sm:$0xff] %vm1639, %v1617
        %1651 = vst.msk [vmem:[#allocation2 + $0x58] sm:$0xff] %vm1639, %v1618
        %1652 = vst.msk [vmem:[#allocation2 + $0x60] sm:$0xff] %vm1639, %v1619
        %1653 = vst.msk [vmem:[#allocation2 + $0x68] sm:$0xff] %vm1639, %v1620
        %1654 = vst.msk [vmem:[#allocation2 + $0x70] sm:$0xff] %vm1639, %v1621
        %1655 = vst.msk [vmem:[#allocation2 + $0x78] sm:$0xff] %vm1639, %v1622
        %1656 = vst.msk [vmem:[#allocation2 + $0x80] sm:$0xff] %vm1639, %v1623
        %1657 = vst.msk [vmem:[#allocation2 + $0x88] sm:$0xff] %vm1639, %v1624
        %1658 = vst.msk [vmem:[#allocation2 + $0x90] sm:$0xff] %vm1639, %v1625
        %1659 = vst.msk [vmem:[#allocation2 + $0x98] sm:$0xff] %vm1639, %v1626
        %1660 = vst.msk [vmem:[#allocation2 + $0xa0] sm:$0xff] %vm1639, %v1627
        %1661 = vst.msk [vmem:[#allocation2 + $0xa8] sm:$0xff] %vm1639, %v1628
        %1662 = vst.msk [vmem:[#allocation2 + $0xb0] sm:$0xff] %vm1639, %v1629
        %1663 = vst.msk [vmem:[#allocation2 + $0xb8] sm:$0xff] %vm1639, %v1630
        %1664 = vst.msk [vmem:[#allocation2 + $0xc0] sm:$0xff] %vm1639, %v1631
        %1665 = vst.msk [vmem:[#allocation2 + $0xc8] sm:$0xff] %vm1639, %v1632
        %1666 = vst.msk [vmem:[#allocation2 + $0xd0] sm:$0xff] %vm1639, %v1633
        %1667 = vst.msk [vmem:[#allocation2 + $0xd8] sm:$0xff] %vm1639, %v1634
        %1668 = vst.msk [vmem:[#allocation2 + $0xe0] sm:$0xff] %vm1639, %v1635
        %1669 = vst.msk [vmem:[#allocation2 + $0xe8] sm:$0xff] %vm1639, %v1636
        %1670 = vst.msk [vmem:[#allocation2 + $0xf0] sm:$0xff] %vm1639, %v1637
        %1671 = vst.msk [vmem:[#allocation2 + $0xf8] sm:$0xff] %vm1639, %v1638
        %v1672 = vld [vmem:[#allocation3] sm:$0xff]
        %v1673 = vld [vmem:[#allocation3 + $0x8] sm:$0xff]
        %v1674 = vmul.f32 %v453, %v453
        %v1675 = vmul.f32 %v454, %v454
        %v1676 = vmul.f32 %v455, %v455
        %v1677 = vmul.f32 %v456, %v456
        %v1678 = vmul.f32 %v457, %v457
        %v1679 = vmul.f32 %v458, %v458
        %v1680 = vmul.f32 %v459, %v459
        %v1681 = vmul.f32 %v460, %v460
        %v1682 = vmul.f32 %v461, %v461
        %v1683 = vmul.f32 %v462, %v462
        %v1684 = vmul.f32 %v463, %v463
        %v1685 = vmul.f32 %v464, %v464
        %v1686 = vmul.f32 %v465, %v465
        %v1687 = vmul.f32 %v466, %v466
        %v1688 = vmul.f32 %v467, %v467
        %v1689 = vmul.f32 %v468, %v468
        %v1690 = vmul.f32 %v469, %v469
        %v1691 = vmul.f32 %v470, %v470
        %v1692 = vmul.f32 %v471, %v471
        %v1693 = vmul.f32 %v472, %v472
        %v1694 = vmul.f32 %v473, %v473
        %v1695 = vmul.f32 %v474, %v474
        %v1696 = vmul.f32 %v475, %v475
        %v1697 = vmul.f32 %v476, %v476
        %v1698 = vmul.f32 %v477, %v477
        %v1699 = vmul.f32 %v478, %v478
        %v1700 = vmul.f32 %v479, %v479
        %v1701 = vmul.f32 %v480, %v480
        %v1702 = vmul.f32 %v481, %v481
        %v1703 = vmul.f32 %v482, %v482
        %v1704 = vmul.f32 %v483, %v483
        %v1705 = vmul.f32 %v484, %v484
        %v1706 = vmul.f32 %v485, %v485
        %v1707 = vmul.f32 %v486, %v486
        %v1708 = vmul.f32 %v487, %v487
        %v1709 = vmul.f32 %v488, %v488
        %v1710 = vmul.f32 %v489, %v489
        %v1711 = vmul.f32 %v490, %v490
        %v1712 = vmul.f32 %v491, %v491
        %v1713 = vmul.f32 %v492, %v492
        %v1714 = vmul.f32 %v493, %v493
        %v1715 = vmul.f32 %v494, %v494
        %v1716 = vmul.f32 %v495, %v495
        %v1717 = vmul.f32 %v496, %v496
        %v1718 = vmul.f32 %v497, %v497
        %v1719 = vmul.f32 %v498, %v498
        %v1720 = vmul.f32 %v499, %v499
        %v1721 = vmul.f32 %v500, %v500
        %v1722 = vmul.f32 %v501, %v501
        %v1723 = vmul.f32 %v502, %v502
        %v1724 = vmul.f32 %v503, %v503
        %v1725 = vmul.f32 %v504, %v504
        %v1726 = vmul.f32 %v505, %v505
        %v1727 = vmul.f32 %v506, %v506
        %v1728 = vmul.f32 %v507, %v507
        %v1729 = vmul.f32 %v508, %v508
        %v1730 = vmul.f32 %v509, %v509
        %v1731 = vmul.f32 %v510, %v510
        %v1732 = vmul.f32 %v511, %v511
        %v1733 = vmul.f32 %v512, %v512
        %v1734 = vmul.f32 %v513, %v513
        %v1735 = vmul.f32 %v514, %v514
        %v1736 = vmul.f32 %v515, %v515
        %v1737 = vmul.f32 %v516, %v516
        %v1738 = vmul.f32 %v517, %v517
        %v1739 = vmul.f32 %v518, %v518
        %v1740 = vmul.f32 %v519, %v519
        %v1741 = vmul.f32 %v520, %v520
        %v1742 = vmul.f32 %v521, %v521
        %v1743 = vmul.f32 %v522, %v522
        %v1744 = vmul.f32 %v523, %v523
        %v1745 = vmul.f32 %v524, %v524
        %v1746 = vmul.f32 %v525, %v525
        %v1747 = vmul.f32 %v526, %v526
        %v1748 = vmul.f32 %v527, %v527
        %v1749 = vmul.f32 %v528, %v528
        %v1750 = vmul.f32 %v529, %v529
        %v1751 = vmul.f32 %v530, %v530
        %v1752 = vmul.f32 %v531, %v531
        %v1753 = vmul.f32 %v532, %v532
        %v1754 = vmul.f32 %v533, %v533
        %v1755 = vmul.f32 %v534, %v534
        %v1756 = vmul.f32 %v535, %v535
        %v1757 = vmul.f32 %v536, %v536
        %v1758 = vmul.f32 %v537, %v537
        %v1759 = vmul.f32 %v538, %v538
        %v1760 = vmul.f32 %v539, %v539
        %v1761 = vmul.f32 %v540, %v540
        %v1762 = vmul.f32 %v541, %v541
        %v1763 = vmul.f32 %v542, %v542
        %v1764 = vmul.f32 %v543, %v543
        %v1765 = vmul.f32 %v544, %v544
        %v1766 = vmul.f32 %v545, %v545
        %v1767 = vmul.f32 %v546, %v546
        %v1768 = vmul.f32 %v547, %v547
        %v1769 = vmul.f32 %v548, %v548
        %v1770 = vmul.f32 %v549, %v549
        %v1771 = vmul.f32 %v550, %v550
        %v1772 = vmul.f32 %v551, %v551
        %v1773 = vmul.f32 %v552, %v552
        %v1774 = vmul.f32 %v553, %v553
        %v1775 = vmul.f32 %v554, %v554
        %v1776 = vmul.f32 %v555, %v555
        %v1777 = vmul.f32 %v556, %v556
        %v1778 = vmul.f32 %v557, %v557
        %v1779 = vmul.f32 %v558, %v558
        %v1780 = vmul.f32 %v559, %v559
        %v1781 = vmul.f32 %v560, %v560
        %v1782 = vmul.f32 %v561, %v561
        %v1783 = vmul.f32 %v562, %v562
        %v1784 = vmul.f32 %v563, %v563
        %v1785 = vmul.f32 %v564, %v564
        %v1786 = vmul.f32 %v565, %v565
        %v1787 = vmul.f32 %v566, %v566
        %v1788 = vmul.f32 %v567, %v567
        %v1789 = vmul.f32 %v568, %v568
        %v1790 = vmul.f32 %v569, %v569
        %v1791 = vmul.f32 %v570, %v570
        %v1792 = vmul.f32 %v571, %v571
        %v1793 = vmul.f32 %v572, %v572
        %v1794 = vmul.f32 %v573, %v573
        %v1795 = vmul.f32 %v574, %v574
        %v1796 = vmul.f32 %v575, %v575
        %v1797 = vmul.f32 %v576, %v576
        %v1798 = vmul.f32 %v577, %v577
        %v1799 = vmul.f32 %v578, %v578
        %v1800 = vmul.f32 %v579, %v579
        %v1801 = vmul.f32 %v580, %v580
        %1802 = vmatprep.subr.mxu0 %v1675
        %1803 = vmatpush1.xpose.msra.mxu0 %v1674
        %1804 = vmatprep.subr.mxu0 %v1679
        %1805 = vmatpush1.xpose.msra.mxu0 %v1678
        %1806 = vmatprep.subr.mxu0 %v1683
        %1807 = vmatpush1.xpose.msra.mxu0 %v1682
        %1808 = vmatprep.subr.mxu0 %v1687
        %1809 = vmatpush1.xpose.msra.mxu0 %v1686
        %1810 = vmatprep.subr.mxu0 %v1691
        %1811 = vmatpush1.xpose.msra.mxu0 %v1690
        %1812 = vmatprep.subr.mxu0 %v1695
        %1813 = vmatpush1.xpose.msra.mxu0 %v1694
        %1814 = vmatprep.subr.mxu0 %v1699
        %1815 = vmatpush1.xpose.msra.mxu0 %v1698
        %1816 = vmatprep.subr.mxu0 %v1703
        %1817 = vmatpush1.xpose.msra.mxu0 %v1702
        %1818 = vmatprep.subr.mxu0 %v1707
        %1819 = vmatpush1.xpose.msra.mxu0 %v1706
        %1820 = vmatprep.subr.mxu0 %v1711
        %1821 = vmatpush1.xpose.msra.mxu0 %v1710
        %1822 = vmatprep.subr.mxu0 %v1715
        %1823 = vmatpush1.xpose.msra.mxu0 %v1714
        %1824 = vmatprep.subr.mxu0 %v1719
        %1825 = vmatpush1.xpose.msra.mxu0 %v1718
        %1826 = vmatprep.subr.mxu0 %v1723
        %1827 = vmatpush1.xpose.msra.mxu0 %v1722
        %1828 = vmatprep.subr.mxu0 %v1727
        %1829 = vmatpush1.xpose.msra.mxu0 %v1726
        %1830 = vmatprep.subr.mxu0 %v1731
        %1831 = vmatpush1.xpose.msra.mxu0 %v1730
        %1832 = vmatprep.subr.mxu0 %v1735
        %1833 = vmatpush1.xpose.msra.mxu0 %v1734
        %1834 = vmatprep.subr.mxu0 %v1739
        %1835 = vmatpush1.xpose.msra.mxu0 %v1738
        %1836 = vmatprep.subr.mxu0 %v1743
        %1837 = vmatpush1.xpose.msra.mxu0 %v1742
        %1838 = vmatprep.subr.mxu0 %v1747
        %1839 = vmatpush1.xpose.msra.mxu0 %v1746
        %1840 = vmatprep.subr.mxu0 %v1751
        %1841 = vmatpush1.xpose.msra.mxu0 %v1750
        %1842 = vmatprep.subr.mxu0 %v1755
        %1843 = vmatpush1.xpose.msra.mxu0 %v1754
        %1844 = vmatprep.subr.mxu0 %v1759
        %1845 = vmatpush1.xpose.msra.mxu0 %v1758
        %1846 = vmatprep.subr.mxu0 %v1763
        %1847 = vmatpush1.xpose.msra.mxu0 %v1762
        %1848 = vmatprep.subr.mxu0 %v1767
        %1849 = vmatpush1.xpose.msra.mxu0 %v1766
        %1850 = vmatprep.subr.mxu0 %v1771
        %1851 = vmatpush1.xpose.msra.mxu0 %v1770
        %1852 = vmatprep.subr.mxu0 %v1775
        %1853 = vmatpush1.xpose.msra.mxu0 %v1774
        %1854 = vmatprep.subr.mxu0 %v1779
        %1855 = vmatpush1.xpose.msra.mxu0 %v1778
        %1856 = vmatprep.subr.mxu0 %v1783
        %1857 = vmatpush1.xpose.msra.mxu0 %v1782
        %1858 = vmatprep.subr.mxu0 %v1787
        %1859 = vmatpush1.xpose.msra.mxu0 %v1786
        %1860 = vmatprep.subr.mxu0 %v1791
        %1861 = vmatpush1.xpose.msra.mxu0 %v1790
        %1862 = vmatprep.subr.mxu0 %v1795
        %1863 = vmatpush1.xpose.msra.mxu0 %v1794
        %1864 = vmatprep.subr.mxu0 %v1799
        %1865 = vmatpush1.xpose.msra.mxu0 %v1798
        %1866 = vmatprep.mubr.f32.mxu0 1.0
        %1867 = vmatmul.mubr.f32.gmra.mrb[0].mxu0 1.0
        %v1868 = vpop.f32.mrb[0].mxu0
        %v1869 = vadd.f32 0.0, %v1868
        %v1870 = vpop.f32.mrb[0].mxu0
        %v1871 = vadd.f32 0.0, %v1870
        %1872 = vdwg.mxu0
        %1873 = vmatprep.subr.mxu0 %v1677
        %1874 = vmatpush1.xpose.msra.mxu0 %v1676
        %1875 = vmatprep.subr.mxu0 %v1681
        %1876 = vmatpush1.xpose.msra.mxu0 %v1680
        %1877 = vmatprep.subr.mxu0 %v1685
        %1878 = vmatpush1.xpose.msra.mxu0 %v1684
        %1879 = vmatprep.subr.mxu0 %v1689
        %1880 = vmatpush1.xpose.msra.mxu0 %v1688
        %1881 = vmatprep.subr.mxu0 %v1693
        %1882 = vmatpush1.xpose.msra.mxu0 %v1692
        %1883 = vmatprep.subr.mxu0 %v1697
        %1884 = vmatpush1.xpose.msra.mxu0 %v1696
        %1885 = vmatprep.subr.mxu0 %v1701
        %1886 = vmatpush1.xpose.msra.mxu0 %v1700
        %1887 = vmatprep.subr.mxu0 %v1705
        %1888 = vmatpush1.xpose.msra.mxu0 %v1704
        %1889 = vmatprep.subr.mxu0 %v1709
        %1890 = vmatpush1.xpose.msra.mxu0 %v1708
        %1891 = vmatprep.subr.mxu0 %v1713
        %1892 = vmatpush1.xpose.msra.mxu0 %v1712
        %1893 = vmatprep.subr.mxu0 %v1717
        %1894 = vmatpush1.xpose.msra.mxu0 %v1716
        %1895 = vmatprep.subr.mxu0 %v1721
        %1896 = vmatpush1.xpose.msra.mxu0 %v1720
        %1897 = vmatprep.subr.mxu0 %v1725
        %1898 = vmatpush1.xpose.msra.mxu0 %v1724
        %1899 = vmatprep.subr.mxu0 %v1729
        %1900 = vmatpush1.xpose.msra.mxu0 %v1728
        %1901 = vmatprep.subr.mxu0 %v1733
        %1902 = vmatpush1.xpose.msra.mxu0 %v1732
        %1903 = vmatprep.subr.mxu0 %v1737
        %1904 = vmatpush1.xpose.msra.mxu0 %v1736
        %1905 = vmatprep.subr.mxu0 %v1741
        %1906 = vmatpush1.xpose.msra.mxu0 %v1740
        %1907 = vmatprep.subr.mxu0 %v1745
        %1908 = vmatpush1.xpose.msra.mxu0 %v1744
        %1909 = vmatprep.subr.mxu0 %v1749
        %1910 = vmatpush1.xpose.msra.mxu0 %v1748
        %1911 = vmatprep.subr.mxu0 %v1753
        %1912 = vmatpush1.xpose.msra.mxu0 %v1752
        %1913 = vmatprep.subr.mxu0 %v1757
        %1914 = vmatpush1.xpose.msra.mxu0 %v1756
        %1915 = vmatprep.subr.mxu0 %v1761
        %1916 = vmatpush1.xpose.msra.mxu0 %v1760
        %1917 = vmatprep.subr.mxu0 %v1765
        %1918 = vmatpush1.xpose.msra.mxu0 %v1764
        %1919 = vmatprep.subr.mxu0 %v1769
        %1920 = vmatpush1.xpose.msra.mxu0 %v1768
        %1921 = vmatprep.subr.mxu0 %v1773
        %1922 = vmatpush1.xpose.msra.mxu0 %v1772
        %1923 = vmatprep.subr.mxu0 %v1777
        %1924 = vmatpush1.xpose.msra.mxu0 %v1776
        %1925 = vmatprep.subr.mxu0 %v1781
        %1926 = vmatpush1.xpose.msra.mxu0 %v1780
        %1927 = vmatprep.subr.mxu0 %v1785
        %1928 = vmatpush1.xpose.msra.mxu0 %v1784
        %1929 = vmatprep.subr.mxu0 %v1789
        %1930 = vmatpush1.xpose.msra.mxu0 %v1788
        %1931 = vmatprep.subr.mxu0 %v1793
        %1932 = vmatpush1.xpose.msra.mxu0 %v1792
        %1933 = vmatprep.subr.mxu0 %v1797
        %1934 = vmatpush1.xpose.msra.mxu0 %v1796
        %1935 = vmatprep.subr.mxu0 %v1801
        %1936 = vmatpush1.xpose.msra.mxu0 %v1800
        %1937 = vmatprep.mubr.f32.mxu0 1.0
        %1938 = vmatmul.mubr.f32.gmra.mrb[0].mxu0 1.0
        %v1939 = vpop.f32.mrb[0].mxu0
        %v1940 = vadd.f32 %v1869, %v1939
        %v1941 = vpop.f32.mrb[0].mxu0
        %v1942 = vadd.f32 %v1871, %v1941
        %1943 = vdwg.mxu0
        %v1944 = vadd.f32 %v1672, %v1940
        %v1945 = vadd.f32 %v1673, %v1942
        %1946 = vst [vmem:[#allocation3] sm:$0xff] %v1944
        %1947 = vst [vmem:[#allocation3 + $0x8] sm:$0xff] %v1945
        // Predicated region
        $region41: #{norm_linear_product.1} parent=27 // pred_check
          %p1948 = pneg %p222
        $region42: #{norm_linear_product.1} parent=27 // pred_check_branch
          %1950 = sbr.rel (%p1948) target = $region44
        $region43: #{norm_linear_product.1} parent=27 // pred_region
          %v1951 = vld [vmem:[#allocation2] sm:$0xff]
          %v1952 = vld [vmem:[#allocation2 + $0x8] sm:$0xff]
          %v1953 = vld [vmem:[#allocation2 + $0x10] sm:$0xff]
          %v1954 = vld [vmem:[#allocation2 + $0x18] sm:$0xff]
          %v1955 = vld [vmem:[#allocation2 + $0x20] sm:$0xff]
          %v1956 = vld [vmem:[#allocation2 + $0x28] sm:$0xff]
          %v1957 = vld [vmem:[#allocation2 + $0x30] sm:$0xff]
          %v1958 = vld [vmem:[#allocation2 + $0x38] sm:$0xff]
          %v1959 = vld [vmem:[#allocation2 + $0x40] sm:$0xff]
          %v1960 = vld [vmem:[#allocation2 + $0x48] sm:$0xff]
          %v1961 = vld [vmem:[#allocation2 + $0x50] sm:$0xff]
          %v1962 = vld [vmem:[#allocation2 + $0x58] sm:$0xff]
          %v1963 = vld [vmem:[#allocation2 + $0x60] sm:$0xff]
          %v1964 = vld [vmem:[#allocation2 + $0x68] sm:$0xff]
          %v1965 = vld [vmem:[#allocation2 + $0x70] sm:$0xff]
          %v1966 = vld [vmem:[#allocation2 + $0x78] sm:$0xff]
          %v1967 = vld [vmem:[#allocation2 + $0x80] sm:$0xff]
          %v1968 = vld [vmem:[#allocation2 + $0x88] sm:$0xff]
          %v1969 = vld [vmem:[#allocation2 + $0x90] sm:$0xff]
          %v1970 = vld [vmem:[#allocation2 + $0x98] sm:$0xff]
          %v1971 = vld [vmem:[#allocation2 + $0xa0] sm:$0xff]
          %v1972 = vld [vmem:[#allocation2 + $0xa8] sm:$0xff]
          %v1973 = vld [vmem:[#allocation2 + $0xb0] sm:$0xff]
          %v1974 = vld [vmem:[#allocation2 + $0xb8] sm:$0xff]
          %v1975 = vld [vmem:[#allocation2 + $0xc0] sm:$0xff]
          %v1976 = vld [vmem:[#allocation2 + $0xc8] sm:$0xff]
          %v1977 = vld [vmem:[#allocation2 + $0xd0] sm:$0xff]
          %v1978 = vld [vmem:[#allocation2 + $0xd8] sm:$0xff]
          %v1979 = vld [vmem:[#allocation2 + $0xe0] sm:$0xff]
          %v1980 = vld [vmem:[#allocation2 + $0xe8] sm:$0xff]
          %v1981 = vld [vmem:[#allocation2 + $0xf0] sm:$0xff]
          %v1982 = vld [vmem:[#allocation2 + $0xf8] sm:$0xff]
          %v1983 = vmax.f32 %v1951, 1e-24
          %v1984 = vmax.f32 %v1952, 1e-24
          %v1985 = vmax.f32 %v1953, 1e-24
          %v1986 = vmax.f32 %v1954, 1e-24
          %v1987 = vmax.f32 %v1955, 1e-24
          %v1988 = vmax.f32 %v1956, 1e-24
          %v1989 = vmax.f32 %v1957, 1e-24
          %v1990 = vmax.f32 %v1958, 1e-24
          %v1991 = vmax.f32 %v1959, 1e-24
          %v1992 = vmax.f32 %v1960, 1e-24
          %v1993 = vmax.f32 %v1961, 1e-24
          %v1994 = vmax.f32 %v1962, 1e-24
          %v1995 = vmax.f32 %v1963, 1e-24
          %v1996 = vmax.f32 %v1964, 1e-24
          %v1997 = vmax.f32 %v1965, 1e-24
          %v1998 = vmax.f32 %v1966, 1e-24
          %v1999 = vmax.f32 %v1967, 1e-24
          %v2000 = vmax.f32 %v1968, 1e-24
          %v2001 = vmax.f32 %v1969, 1e-24
          %v2002 = vmax.f32 %v1970, 1e-24
          %v2003 = vmax.f32 %v1971, 1e-24
          %v2004 = vmax.f32 %v1972, 1e-24
          %v2005 = vmax.f32 %v1973, 1e-24
          %v2006 = vmax.f32 %v1974, 1e-24
          %v2007 = vmax.f32 %v1975, 1e-24
          %v2008 = vmax.f32 %v1976, 1e-24
          %v2009 = vmax.f32 %v1977, 1e-24
          %v2010 = vmax.f32 %v1978, 1e-24
          %v2011 = vmax.f32 %v1979, 1e-24
          %v2012 = vmax.f32 %v1980, 1e-24
          %v2013 = vmax.f32 %v1981, 1e-24
          %v2014 = vmax.f32 %v1982, 1e-24
          %v2015 = vrsqrt.pop %v1983
          %v2016 = vrsqrt.pop %v1984
          %v2017 = vrsqrt.pop %v1985
          %v2018 = vrsqrt.pop %v1986
          %v2019 = vrsqrt.pop %v1987
          %v2020 = vrsqrt.pop %v1988
          %v2021 = vrsqrt.pop %v1989
          %v2022 = vrsqrt.pop %v1990
          %v2023 = vrsqrt.pop %v1991
          %v2024 = vrsqrt.pop %v1992
          %v2025 = vrsqrt.pop %v1993
          %v2026 = vrsqrt.pop %v1994
          %v2027 = vrsqrt.pop %v1995
          %v2028 = vrsqrt.pop %v1996
          %v2029 = vrsqrt.pop %v1997
          %v2030 = vrsqrt.pop %v1998
          %v2031 = vrsqrt.pop %v1999
          %v2032 = vrsqrt.pop %v2000
          %v2033 = vrsqrt.pop %v2001
          %v2034 = vrsqrt.pop %v2002
          %v2035 = vrsqrt.pop %v2003
          %v2036 = vrsqrt.pop %v2004
          %v2037 = vrsqrt.pop %v2005
          %v2038 = vrsqrt.pop %v2006
          %v2039 = vrsqrt.pop %v2007
          %v2040 = vrsqrt.pop %v2008
          %v2041 = vrsqrt.pop %v2009
          %v2042 = vrsqrt.pop %v2010
          %v2043 = vrsqrt.pop %v2011
          %v2044 = vrsqrt.pop %v2012
          %v2045 = vrsqrt.pop %v2013
          %v2046 = vrsqrt.pop %v2014
          %v2047 = vld [vmem:[#allocation3] ss:$8 sm:$0x3]
          %v2048 = vmax.f32 %v2047, 1e-24
          %v2049 = vrsqrt.pop %v2048
          %v2050 = vld [vmem:[%s215] sm:$0xff]
          %v2051 = vld [vmem:[%s215 + $0x8] sm:$0xff]
          %v2052 = vld [vmem:[%s215 + $0x10] sm:$0xff]
          %v2053 = vld [vmem:[%s215 + $0x18] sm:$0xff]
          %v2054 = vld [vmem:[%s215 + $0x20] sm:$0xff]
          %v2055 = vld [vmem:[%s215 + $0x28] sm:$0xff]
          %v2056 = vld [vmem:[%s215 + $0x30] sm:$0xff]
          %v2057 = vld [vmem:[%s215 + $0x38] sm:$0xff]
          %v2058 = vld [vmem:[%s215 + $0x40] sm:$0xff]
          %v2059 = vld [vmem:[%s215 + $0x48] sm:$0xff]
          %v2060 = vld [vmem:[%s215 + $0x50] sm:$0xff]
          %v2061 = vld [vmem:[%s215 + $0x58] sm:$0xff]
          %v2062 = vld [vmem:[%s215 + $0x60] sm:$0xff]
          %v2063 = vld [vmem:[%s215 + $0x68] sm:$0xff]
          %v2064 = vld [vmem:[%s215 + $0x70] sm:$0xff]
          %v2065 = vld [vmem:[%s215 + $0x78] sm:$0xff]
          %v2066 = vld [vmem:[%s215 + $0x80] sm:$0xff]
          %v2067 = vld [vmem:[%s215 + $0x88] sm:$0xff]
          %v2068 = vld [vmem:[%s215 + $0x90] sm:$0xff]
          %v2069 = vld [vmem:[%s215 + $0x98] sm:$0xff]
          %v2070 = vld [vmem:[%s215 + $0xa0] sm:$0xff]
          %v2071 = vld [vmem:[%s215 + $0xa8] sm:$0xff]
          %v2072 = vld [vmem:[%s215 + $0xb0] sm:$0xff]
          %v2073 = vld [vmem:[%s215 + $0xb8] sm:$0xff]
          %v2074 = vld [vmem:[%s215 + $0xc0] sm:$0xff]
          %v2075 = vld [vmem:[%s215 + $0xc8] sm:$0xff]
          %v2076 = vld [vmem:[%s215 + $0xd0] sm:$0xff]
          %v2077 = vld [vmem:[%s215 + $0xd8] sm:$0xff]
          %v2078 = vld [vmem:[%s215 + $0xe0] sm:$0xff]
          %v2079 = vld [vmem:[%s215 + $0xe8] sm:$0xff]
          %v2080 = vld [vmem:[%s215 + $0xf0] sm:$0xff]
          %v2081 = vld [vmem:[%s215 + $0xf8] sm:$0xff]
          %v2082 = vld [vmem:[%s215 + $0x100] sm:$0xff]
          %v2083 = vld [vmem:[%s215 + $0x108] sm:$0xff]
          %v2084 = vld [vmem:[%s215 + $0x110] sm:$0xff]
          %v2085 = vld [vmem:[%s215 + $0x118] sm:$0xff]
          %v2086 = vld [vmem:[%s215 + $0x120] sm:$0xff]
          %v2087 = vld [vmem:[%s215 + $0x128] sm:$0xff]
          %v2088 = vld [vmem:[%s215 + $0x130] sm:$0xff]
          %v2089 = vld [vmem:[%s215 + $0x138] sm:$0xff]
          %v2090 = vld [vmem:[%s215 + $0x140] sm:$0xff]
          %v2091 = vld [vmem:[%s215 + $0x148] sm:$0xff]
          %v2092 = vld [vmem:[%s215 + $0x150] sm:$0xff]
          %v2093 = vld [vmem:[%s215 + $0x158] sm:$0xff]
          %v2094 = vld [vmem:[%s215 + $0x160] sm:$0xff]
          %v2095 = vld [vmem:[%s215 + $0x168] sm:$0xff]
          %v2096 = vld [vmem:[%s215 + $0x170] sm:$0xff]
          %v2097 = vld [vmem:[%s215 + $0x178] sm:$0xff]
          %v2098 = vld [vmem:[%s215 + $0x180] sm:$0xff]
          %v2099 = vld [vmem:[%s215 + $0x188] sm:$0xff]
          %v2100 = vld [vmem:[%s215 + $0x190] sm:$0xff]
          %v2101 = vld [vmem:[%s215 + $0x198] sm:$0xff]
          %v2102 = vld [vmem:[%s215 + $0x1a0] sm:$0xff]
          %v2103 = vld [vmem:[%s215 + $0x1a8] sm:$0xff]
          %v2104 = vld [vmem:[%s215 + $0x1b0] sm:$0xff]
          %v2105 = vld [vmem:[%s215 + $0x1b8] sm:$0xff]
          %v2106 = vld [vmem:[%s215 + $0x1c0] sm:$0xff]
          %v2107 = vld [vmem:[%s215 + $0x1c8] sm:$0xff]
          %v2108 = vld [vmem:[%s215 + $0x1d0] sm:$0xff]
          %v2109 = vld [vmem:[%s215 + $0x1d8] sm:$0xff]
          %v2110 = vld [vmem:[%s215 + $0x1e0] sm:$0xff]
          %v2111 = vld [vmem:[%s215 + $0x1e8] sm:$0xff]
          %v2112 = vld [vmem:[%s215 + $0x1f0] sm:$0xff]
          %v2113 = vld [vmem:[%s215 + $0x1f8] sm:$0xff]
          %2115 = vset.pattern.permute.xlu0 0
          %2116 = vperm.xlu0 %2115, %v2015
          %v2117 = vpop.permute.xlu0 %2116
          %2120 = vset.pattern.permute.xlu0 0
          %2121 = vperm.xlu0 %2120, %v2016
          %v2122 = vpop.permute.xlu0 %2121
          %2125 = vset.pattern.permute.xlu0 0
          %2126 = vperm.xlu0 %2125, %v2017
          %v2127 = vpop.permute.xlu0 %2126
          %2130 = vset.pattern.permute.xlu0 0
          %2131 = vperm.xlu0 %2130, %v2018
          %v2132 = vpop.permute.xlu0 %2131
          %2135 = vset.pattern.permute.xlu0 0
          %2136 = vperm.xlu0 %2135, %v2019
          %v2137 = vpop.permute.xlu0 %2136
          %2140 = vset.pattern.permute.xlu0 0
          %2141 = vperm.xlu0 %2140, %v2020
          %v2142 = vpop.permute.xlu0 %2141
          %2145 = vset.pattern.permute.xlu0 0
          %2146 = vperm.xlu0 %2145, %v2021
          %v2147 = vpop.permute.xlu0 %2146
          %2150 = vset.pattern.permute.xlu0 0
          %2151 = vperm.xlu0 %2150, %v2022
          %v2152 = vpop.permute.xlu0 %2151
          %2155 = vset.pattern.permute.xlu0 0
          %2156 = vperm.xlu0 %2155, %v2023
          %v2157 = vpop.permute.xlu0 %2156
          %2160 = vset.pattern.permute.xlu0 0
          %2161 = vperm.xlu0 %2160, %v2024
          %v2162 = vpop.permute.xlu0 %2161
          %2165 = vset.pattern.permute.xlu0 0
          %2166 = vperm.xlu0 %2165, %v2025
          %v2167 = vpop.permute.xlu0 %2166
          %2170 = vset.pattern.permute.xlu0 0
          %2171 = vperm.xlu0 %2170, %v2026
          %v2172 = vpop.permute.xlu0 %2171
          %2175 = vset.pattern.permute.xlu0 0
          %2176 = vperm.xlu0 %2175, %v2027
          %v2177 = vpop.permute.xlu0 %2176
          %2180 = vset.pattern.permute.xlu0 0
          %2181 = vperm.xlu0 %2180, %v2028
          %v2182 = vpop.permute.xlu0 %2181
          %2185 = vset.pattern.permute.xlu0 0
          %2186 = vperm.xlu0 %2185, %v2029
          %v2187 = vpop.permute.xlu0 %2186
          %2190 = vset.pattern.permute.xlu0 0
          %2191 = vperm.xlu0 %2190, %v2030
          %v2192 = vpop.permute.xlu0 %2191
          %2195 = vset.pattern.permute.xlu0 0
          %2196 = vperm.xlu0 %2195, %v2031
          %v2197 = vpop.permute.xlu0 %2196
          %2200 = vset.pattern.permute.xlu0 0
          %2201 = vperm.xlu0 %2200, %v2032
          %v2202 = vpop.permute.xlu0 %2201
          %2205 = vset.pattern.permute.xlu0 0
          %2206 = vperm.xlu0 %2205, %v2033
          %v2207 = vpop.permute.xlu0 %2206
          %2210 = vset.pattern.permute.xlu0 0
          %2211 = vperm.xlu0 %2210, %v2034
          %v2212 = vpop.permute.xlu0 %2211
          %2215 = vset.pattern.permute.xlu0 0
          %2216 = vperm.xlu0 %2215, %v2035
          %v2217 = vpop.permute.xlu0 %2216
          %2220 = vset.pattern.permute.xlu0 0
          %2221 = vperm.xlu0 %2220, %v2036
          %v2222 = vpop.permute.xlu0 %2221
          %2225 = vset.pattern.permute.xlu0 0
          %2226 = vperm.xlu0 %2225, %v2037
          %v2227 = vpop.permute.xlu0 %2226
          %2230 = vset.pattern.permute.xlu0 0
          %2231 = vperm.xlu0 %2230, %v2038
          %v2232 = vpop.permute.xlu0 %2231
          %2235 = vset.pattern.permute.xlu0 0
          %2236 = vperm.xlu0 %2235, %v2039
          %v2237 = vpop.permute.xlu0 %2236
          %2240 = vset.pattern.permute.xlu0 0
          %2241 = vperm.xlu0 %2240, %v2040
          %v2242 = vpop.permute.xlu0 %2241
          %2245 = vset.pattern.permute.xlu0 0
          %2246 = vperm.xlu0 %2245, %v2041
          %v2247 = vpop.permute.xlu0 %2246
          %2250 = vset.pattern.permute.xlu0 0
          %2251 = vperm.xlu0 %2250, %v2042
          %v2252 = vpop.permute.xlu0 %2251
          %2255 = vset.pattern.permute.xlu0 0
          %2256 = vperm.xlu0 %2255, %v2043
          %v2257 = vpop.permute.xlu0 %2256
          %2260 = vset.pattern.permute.xlu0 0
          %2261 = vperm.xlu0 %2260, %v2044
          %v2262 = vpop.permute.xlu0 %2261
          %2265 = vset.pattern.permute.xlu0 0
          %2266 = vperm.xlu0 %2265, %v2045
          %v2267 = vpop.permute.xlu0 %2266
          %2270 = vset.pattern.permute.xlu0 0
          %2271 = vperm.xlu0 %2270, %v2046
          %v2272 = vpop.permute.xlu0 %2271
          %v2274 = vmul.f32 %v2050, %v2117
          %v2275 = vmul.f32 %v2051, %v2117
          %v2276 = vmul.f32 %v2052, %v2122
          %v2277 = vmul.f32 %v2053, %v2122
          %v2278 = vmul.f32 %v2054, %v2127
          %v2279 = vmul.f32 %v2055, %v2127
          %v2280 = vmul.f32 %v2056, %v2132
          %v2281 = vmul.f32 %v2057, %v2132
          %v2282 = vmul.f32 %v2058, %v2137
          %v2283 = vmul.f32 %v2059, %v2137
          %v2284 = vmul.f32 %v2060, %v2142
          %v2285 = vmul.f32 %v2061, %v2142
          %v2286 = vmul.f32 %v2062, %v2147
          %v2287 = vmul.f32 %v2063, %v2147
          %v2288 = vmul.f32 %v2064, %v2152
          %v2289 = vmul.f32 %v2065, %v2152
          %v2290 = vmul.f32 %v2066, %v2157
          %v2291 = vmul.f32 %v2067, %v2157
          %v2292 = vmul.f32 %v2068, %v2162
          %v2293 = vmul.f32 %v2069, %v2162
          %v2294 = vmul.f32 %v2070, %v2167
          %v2295 = vmul.f32 %v2071, %v2167
          %v2296 = vmul.f32 %v2072, %v2172
          %v2297 = vmul.f32 %v2073, %v2172
          %v2298 = vmul.f32 %v2074, %v2177
          %v2299 = vmul.f32 %v2075, %v2177
          %v2300 = vmul.f32 %v2076, %v2182
          %v2301 = vmul.f32 %v2077, %v2182
          %v2302 = vmul.f32 %v2078, %v2187
          %v2303 = vmul.f32 %v2079, %v2187
          %v2304 = vmul.f32 %v2080, %v2192
          %v2305 = vmul.f32 %v2081, %v2192
          %v2306 = vmul.f32 %v2082, %v2197
          %v2307 = vmul.f32 %v2083, %v2197
          %v2308 = vmul.f32 %v2084, %v2202
          %v2309 = vmul.f32 %v2085, %v2202
          %v2310 = vmul.f32 %v2086, %v2207
          %v2311 = vmul.f32 %v2087, %v2207
          %v2312 = vmul.f32 %v2088, %v2212
          %v2313 = vmul.f32 %v2089, %v2212
          %v2314 = vmul.f32 %v2090, %v2217
          %v2315 = vmul.f32 %v2091, %v2217
          %v2316 = vmul.f32 %v2092, %v2222
          %v2317 = vmul.f32 %v2093, %v2222
          %v2318 = vmul.f32 %v2094, %v2227
          %v2319 = vmul.f32 %v2095, %v2227
          %v2320 = vmul.f32 %v2096, %v2232
          %v2321 = vmul.f32 %v2097, %v2232
          %v2322 = vmul.f32 %v2098, %v2237
          %v2323 = vmul.f32 %v2099, %v2237
          %v2324 = vmul.f32 %v2100, %v2242
          %v2325 = vmul.f32 %v2101, %v2242
          %v2326 = vmul.f32 %v2102, %v2247
          %v2327 = vmul.f32 %v2103, %v2247
          %v2328 = vmul.f32 %v2104, %v2252
          %v2329 = vmul.f32 %v2105, %v2252
          %v2330 = vmul.f32 %v2106, %v2257
          %v2331 = vmul.f32 %v2107, %v2257
          %v2332 = vmul.f32 %v2108, %v2262
          %v2333 = vmul.f32 %v2109, %v2262
          %v2334 = vmul.f32 %v2110, %v2267
          %v2335 = vmul.f32 %v2111, %v2267
          %v2336 = vmul.f32 %v2112, %v2272
          %v2337 = vmul.f32 %v2113, %v2272
          %v2339 = vlaneseq
          %v2340 = vshrl.u32 %v2339, 7
          %v2341 = vsub.s32 0, %v2340
          %v2342 = vrot.slane %v2049, %v2341
          %v2343 = vlaneseq
          %v2344 = vshrl.u32 %v2343, 7
          %v2345 = vsub.s32 1, %v2344
          %v2346 = vrot.slane %v2049, %v2345
          %v2349 = vmul.f32 %v2274, %v2342
          %v2350 = vmul.f32 %v2275, %v2346
          %v2351 = vmul.f32 %v2276, %v2342
          %v2352 = vmul.f32 %v2277, %v2346
          %v2353 = vmul.f32 %v2278, %v2342
          %v2354 = vmul.f32 %v2279, %v2346
          %v2355 = vmul.f32 %v2280, %v2342
          %v2356 = vmul.f32 %v2281, %v2346
          %v2357 = vmul.f32 %v2282, %v2342
          %v2358 = vmul.f32 %v2283, %v2346
          %v2359 = vmul.f32 %v2284, %v2342
          %v2360 = vmul.f32 %v2285, %v2346
          %v2361 = vmul.f32 %v2286, %v2342
          %v2362 = vmul.f32 %v2287, %v2346
          %v2363 = vmul.f32 %v2288, %v2342
          %v2364 = vmul.f32 %v2289, %v2346
          %v2365 = vmul.f32 %v2290, %v2342
          %v2366 = vmul.f32 %v2291, %v2346
          %v2367 = vmul.f32 %v2292, %v2342
          %v2368 = vmul.f32 %v2293, %v2346
          %v2369 = vmul.f32 %v2294, %v2342
          %v2370 = vmul.f32 %v2295, %v2346
          %v2371 = vmul.f32 %v2296, %v2342
          %v2372 = vmul.f32 %v2297, %v2346
          %v2373 = vmul.f32 %v2298, %v2342
          %v2374 = vmul.f32 %v2299, %v2346
          %v2375 = vmul.f32 %v2300, %v2342
          %v2376 = vmul.f32 %v2301, %v2346
          %v2377 = vmul.f32 %v2302, %v2342
          %v2378 = vmul.f32 %v2303, %v2346
          %v2379 = vmul.f32 %v2304, %v2342
          %v2380 = vmul.f32 %v2305, %v2346
          %v2381 = vmul.f32 %v2306, %v2342
          %v2382 = vmul.f32 %v2307, %v2346
          %v2383 = vmul.f32 %v2308, %v2342
          %v2384 = vmul.f32 %v2309, %v2346
          %v2385 = vmul.f32 %v2310, %v2342
          %v2386 = vmul.f32 %v2311, %v2346
          %v2387 = vmul.f32 %v2312, %v2342
          %v2388 = vmul.f32 %v2313, %v2346
          %v2389 = vmul.f32 %v2314, %v2342
          %v2390 = vmul.f32 %v2315, %v2346
          %v2391 = vmul.f32 %v2316, %v2342
          %v2392 = vmul.f32 %v2317, %v2346
          %v2393 = vmul.f32 %v2318, %v2342
          %v2394 = vmul.f32 %v2319, %v2346
          %v2395 = vmul.f32 %v2320, %v2342
          %v2396 = vmul.f32 %v2321, %v2346
          %v2397 = vmul.f32 %v2322, %v2342
          %v2398 = vmul.f32 %v2323, %v2346
          %v2399 = vmul.f32 %v2324, %v2342
          %v2400 = vmul.f32 %v2325, %v2346
          %v2401 = vmul.f32 %v2326, %v2342
          %v2402 = vmul.f32 %v2327, %v2346
          %v2403 = vmul.f32 %v2328, %v2342
          %v2404 = vmul.f32 %v2329, %v2346
          %v2405 = vmul.f32 %v2330, %v2342
          %v2406 = vmul.f32 %v2331, %v2346
          %v2407 = vmul.f32 %v2332, %v2342
          %v2408 = vmul.f32 %v2333, %v2346
          %v2409 = vmul.f32 %v2334, %v2342
          %v2410 = vmul.f32 %v2335, %v2346
          %v2411 = vmul.f32 %v2336, %v2342
          %v2412 = vmul.f32 %v2337, %v2346
          %2413 = vst [vmem:[%s215] sm:$0xff] %v2349
          %2414 = vst [vmem:[%s215 + $0x8] sm:$0xff] %v2350
          %2415 = vst [vmem:[%s215 + $0x10] sm:$0xff] %v2351
          %2416 = vst [vmem:[%s215 + $0x18] sm:$0xff] %v2352
          %2417 = vst [vmem:[%s215 + $0x20] sm:$0xff] %v2353
          %2418 = vst [vmem:[%s215 + $0x28] sm:$0xff] %v2354
          %2419 = vst [vmem:[%s215 + $0x30] sm:$0xff] %v2355
          %2420 = vst [vmem:[%s215 + $0x38] sm:$0xff] %v2356
          %2421 = vst [vmem:[%s215 + $0x40] sm:$0xff] %v2357
          %2422 = vst [vmem:[%s215 + $0x48] sm:$0xff] %v2358
          %2423 = vst [vmem:[%s215 + $0x50] sm:$0xff] %v2359
          %2424 = vst [vmem:[%s215 + $0x58] sm:$0xff] %v2360
          %2425 = vst [vmem:[%s215 + $0x60] sm:$0xff] %v2361
          %2426 = vst [vmem:[%s215 + $0x68] sm:$0xff] %v2362
          %2427 = vst [vmem:[%s215 + $0x70] sm:$0xff] %v2363
          %2428 = vst [vmem:[%s215 + $0x78] sm:$0xff] %v2364
          %2429 = vst [vmem:[%s215 + $0x80] sm:$0xff] %v2365
          %2430 = vst [vmem:[%s215 + $0x88] sm:$0xff] %v2366
          %2431 = vst [vmem:[%s215 + $0x90] sm:$0xff] %v2367
          %2432 = vst [vmem:[%s215 + $0x98] sm:$0xff] %v2368
          %2433 = vst [vmem:[%s215 + $0xa0] sm:$0xff] %v2369
          %2434 = vst [vmem:[%s215 + $0xa8] sm:$0xff] %v2370
          %2435 = vst [vmem:[%s215 + $0xb0] sm:$0xff] %v2371
          %2436 = vst [vmem:[%s215 + $0xb8] sm:$0xff] %v2372
          %2437 = vst [vmem:[%s215 + $0xc0] sm:$0xff] %v2373
          %2438 = vst [vmem:[%s215 + $0xc8] sm:$0xff] %v2374
          %2439 = vst [vmem:[%s215 + $0xd0] sm:$0xff] %v2375
          %2440 = vst [vmem:[%s215 + $0xd8] sm:$0xff] %v2376
          %2441 = vst [vmem:[%s215 + $0xe0] sm:$0xff] %v2377
          %2442 = vst [vmem:[%s215 + $0xe8] sm:$0xff] %v2378
          %2443 = vst [vmem:[%s215 + $0xf0] sm:$0xff] %v2379
          %2444 = vst [vmem:[%s215 + $0xf8] sm:$0xff] %v2380
          %2445 = vst [vmem:[%s215 + $0x100] sm:$0xff] %v2381
          %2446 = vst [vmem:[%s215 + $0x108] sm:$0xff] %v2382
          %2447 = vst [vmem:[%s215 + $0x110] sm:$0xff] %v2383
          %2448 = vst [vmem:[%s215 + $0x118] sm:$0xff] %v2384
          %2449 = vst [vmem:[%s215 + $0x120] sm:$0xff] %v2385
          %2450 = vst [vmem:[%s215 + $0x128] sm:$0xff] %v2386
          %2451 = vst [vmem:[%s215 + $0x130] sm:$0xff] %v2387
          %2452 = vst [vmem:[%s215 + $0x138] sm:$0xff] %v2388
          %2453 = vst [vmem:[%s215 + $0x140] sm:$0xff] %v2389
          %2454 = vst [vmem:[%s215 + $0x148] sm:$0xff] %v2390
          %2455 = vst [vmem:[%s215 + $0x150] sm:$0xff] %v2391
          %2456 = vst [vmem:[%s215 + $0x158] sm:$0xff] %v2392
          %2457 = vst [vmem:[%s215 + $0x160] sm:$0xff] %v2393
          %2458 = vst [vmem:[%s215 + $0x168] sm:$0xff] %v2394
          %2459 = vst [vmem:[%s215 + $0x170] sm:$0xff] %v2395
          %2460 = vst [vmem:[%s215 + $0x178] sm:$0xff] %v2396
          %2461 = vst [vmem:[%s215 + $0x180] sm:$0xff] %v2397
          %2462 = vst [vmem:[%s215 + $0x188] sm:$0xff] %v2398
          %2463 = vst [vmem:[%s215 + $0x190] sm:$0xff] %v2399
          %2464 = vst [vmem:[%s215 + $0x198] sm:$0xff] %v2400
          %2465 = vst [vmem:[%s215 + $0x1a0] sm:$0xff] %v2401
          %2466 = vst [vmem:[%s215 + $0x1a8] sm:$0xff] %v2402
          %2467 = vst [vmem:[%s215 + $0x1b0] sm:$0xff] %v2403
          %2468 = vst [vmem:[%s215 + $0x1b8] sm:$0xff] %v2404
          %2469 = vst [vmem:[%s215 + $0x1c0] sm:$0xff] %v2405
          %2470 = vst [vmem:[%s215 + $0x1c8] sm:$0xff] %v2406
          %2471 = vst [vmem:[%s215 + $0x1d0] sm:$0xff] %v2407
          %2472 = vst [vmem:[%s215 + $0x1d8] sm:$0xff] %v2408
          %2473 = vst [vmem:[%s215 + $0x1e0] sm:$0xff] %v2409
          %2474 = vst [vmem:[%s215 + $0x1e8] sm:$0xff] %v2410
          %2475 = vst [vmem:[%s215 + $0x1f0] sm:$0xff] %v2411
          %2476 = vst [vmem:[%s215 + $0x1f8] sm:$0xff] %v2412
        $region44: #{norm_linear_product.1} parent=27 // pred_fallthru
          _
        %s2477 = sand.u32 %s105, 1
        %s2478 = scalar_lea.sflag [#allocation6], %s2477
        %s2479 = sand.u32 %s105, 1
        %s2480 = smul.addr %s2479, 512
        %s2481 = scalar_lea.vmem [#allocation9], %s2480
        // Predicated region
        $region45: #{norm_linear_product.1} parent=27 // pred_check
          %p2482 = pneg %p115
        $region46: #{norm_linear_product.1} parent=27 // pred_check_branch
          %2484 = sbr.rel (%p2482) target = $region48
        $region47: #{norm_linear_product.1} parent=27 // pred_region
          %s2485 = smul.u32 32, %s25
          %s2486 = smul.u32 2, %s26
          %s2488 = ssub.s32 8192, 8192
          %2489 = vsyncadd %s2478, %s2488
          %s2490 = smul.addr %s2485, 4
          %s2491 = sadd.s32 %s2486, %s2490
          %s2492 = smul.addr %s2491, 128
          %s2493 = scalar_lea.hbm %s2, %s2492
          %s2494 = sshll.u32 %s2481, 4
          %s2495 = int_to_ptr.vmem [resolvable:$true] %s2494
          %2500 = dma.vmem_to_hbm [thread:$0]  %s2495, 8192, %s2493, %s2478, 256, 512, 16
        $region48: #{norm_linear_product.1} parent=27 // pred_fallthru
          _
      $region28: #{norm_linear_product.1} parent=5 // pred_fallthru
        _
      %p2501 = scmp.le.s32.totalorder 2, %s15
      // Predicated region
      $region49: #{norm_linear_product.1} parent=5 // pred_check
        %p2502 = pneg %p2501
      $region50: #{norm_linear_product.1} parent=5 // pred_check_branch
        %2504 = sbr.rel (%p2502) target = $region52
      $region51: #{norm_linear_product.1} parent=5 // pred_region
        %s2505 = ssub.s32 %s15, 2
        // Predicated region
        $region53: #{norm_linear_product.1} parent=51 // pred_check
          %p2506 = pneg %p121
        $region54: #{norm_linear_product.1} parent=51 // pred_check_branch
          %2508 = sbr.rel (%p2506) target = $region56
        $region55: #{norm_linear_product.1} parent=51 // pred_region
          %s2509 = sand.u32 %s106, 1
          %s2510 = scalar_lea.sflag [#allocation6], %s2509
          %s2511 = sand.u32 %s106, 1
          %s2512 = smul.addr %s2511, 512
          %s2513 = scalar_lea.vmem [#allocation9], %s2512
          %2514 = dma.done %s2510, 8192
        $region56: #{norm_linear_product.1} parent=51 // pred_fallthru
          _
      $region52: #{norm_linear_product.1} parent=5 // pred_fallthru
        _
    $region6: #{norm_linear_product.1} parent=1 // loop_footer
      %s19 = sadd.s32 1, %s15
    $region7: #{norm_linear_product.1} parent=1 // loop_footer_branch
      %14 = sbr.rel target = $region3
    $region8: #{norm_linear_product.1} parent=1 // loop_exit
      _
    %2515 = vsyncpa [#allocation5], 1
    %s2516 = scalar_lea.sflag [#allocation5], 1
    %2517 = vsyncpa %s2516, 1
    %2518 = vsyncpa [#allocation8], 1
    %s2519 = scalar_lea.sflag [#allocation8], 1
    %2520 = vsyncpa %s2519, 1
    %2521 = vsyncpa [#allocation6], 1
    %s2522 = scalar_lea.sflag [#allocation6], 1
    %2523 = vsyncpa %s2522, 1

</llo_original>
